<compile_context>
chip_gen: v7x
topology: tpu7x:2x2x1
jax: 0.10.0
libtpu: 0.0.40
codegen_flags: <defaults>
</compile_context>

<pallas_src>
import jax
import jax.numpy as jnp
from jax.experimental import pallas as pl
from jax.experimental.pallas import tpu as pltpu

_VMEM_LIMIT = 32 * 1024 * 1024  # safe on v5e/v6e/v7x for these tile sizes


# --------------------------------------------------------------------------
# Pallas kernels
# --------------------------------------------------------------------------
def _conv_pool_kernel(p_ref, w_ref, b_ref, pool_ref, o_ref):
    """Fused conv(as matmul) + bias + tanh + 2x2 avg-pool(as matmul) + tanh.

    p_ref   : (1, K, Min)    im2col patches of one image, pixels on lanes
    w_ref   : (Cout, K)      conv weights (VMEM-resident across the grid)
    b_ref   : (Cout, 1)      conv bias (f32)
    pool_ref: (Min, Mout)    constant 2x2/stride-2 average-pool matrix (x0.25)
    o_ref   : (1, Cout, Mout)
    """
    y = jnp.dot(w_ref[...], p_ref[0], preferred_element_type=jnp.float32)
    y = jnp.tanh(y + b_ref[...])                       # bias + tanh in f32
    z = jnp.dot(y.astype(pool_ref.dtype), pool_ref[...],
                preferred_element_type=jnp.float32)    # avg-pool on the MXU
    o_ref[0] = jnp.tanh(z).astype(o_ref.dtype)


def _head_kernel(x_ref, w3_ref, b3_ref, w4_ref, b4_ref, w5_ref, b5_ref, o_ref):
    """Fused conv3 (dense 400->120) + tanh -> fc1 + tanh -> fc2.

    Lane-dense (Cout, B) orientation: batch lives on the lane axis.
    x_ref: (400, bt); o_ref: (10, bt); weights/biases VMEM-resident.
    """
    h = jnp.dot(w3_ref[...], x_ref[...], preferred_element_type=jnp.float32)
    h = jnp.tanh(h + b3_ref[...])
    h = jnp.dot(w4_ref[...], h.astype(w4_ref.dtype),
                preferred_element_type=jnp.float32)
    h = jnp.tanh(h + b4_ref[...])
    o = jnp.dot(w5_ref[...], h.astype(w5_ref.dtype),
                preferred_element_type=jnp.float32) + b5_ref[...]
    o_ref[...] = o.astype(o_ref.dtype)


# --------------------------------------------------------------------------
# pallas_call wrappers
# --------------------------------------------------------------------------
def conv_pool_stage(patches, w, b, pool_mat):
    """patches: (B, K, Min) -> (B, Cout, Mout). One image per grid step;
    weights / bias / pool matrix stay VMEM-resident (constant index_map)."""
    B, K, Min = patches.shape
    Cout = w.shape[0]
    Mout = pool_mat.shape[1]
    return pl.pallas_call(
        _conv_pool_kernel,
        grid=(B,),
        in_specs=[
            pl.BlockSpec((1, K, Min), lambda i: (i, 0, 0)),
            pl.BlockSpec((Cout, K), lambda i: (0, 0)),
            pl.BlockSpec((Cout, 1), lambda i: (0, 0)),
            pl.BlockSpec((Min, Mout), lambda i: (0, 0)),
        ],
        out_specs=pl.BlockSpec((1, Cout, Mout), lambda i: (i, 0, 0)),
        out_shape=jax.ShapeDtypeStruct((B, Cout, Mout), jnp.float32),
        compiler_params=pltpu.CompilerParams(
            dimension_semantics=("parallel",),
            vmem_limit_bytes=_VMEM_LIMIT),
    )(patches, w, b, pool_mat)


def _batch_tile(n, target=512):
    """Largest safe lane tile over the batch axis (full dim or 128-multiple)."""
    if n <= target:
        return n
    for t in (512, 256, 128):
        if n % t == 0:
            return t
    return n


def head_stage(xt, w3, b3, w4, b4, w5, b5):
    """xt: (400, B) -> logits^T (10, B). Batch tiled on the lane axis."""
    F, B = xt.shape
    bt = _batch_tile(B)
    return pl.pallas_call(
        _head_kernel,
        grid=(B // bt,),
        in_specs=[
            pl.BlockSpec((F, bt), lambda i: (0, i)),
            pl.BlockSpec(w3.shape, lambda i: (0, 0)),
            pl.BlockSpec(b3.shape, lambda i: (0, 0)),
            pl.BlockSpec(w4.shape, lambda i: (0, 0)),
            pl.BlockSpec(b4.shape, lambda i: (0, 0)),
            pl.BlockSpec(w5.shape, lambda i: (0, 0)),
            pl.BlockSpec(b5.shape, lambda i: (0, 0)),
        ],
        out_specs=pl.BlockSpec((10, bt), lambda i: (0, i)),
        out_shape=jax.ShapeDtypeStruct((10, B), jnp.float32),
        compiler_params=pltpu.CompilerParams(
            dimension_semantics=("parallel",),
            vmem_limit_bytes=_VMEM_LIMIT),
    )(xt, w3, b3, w4, b4, w5, b5)


# --------------------------------------------------------------------------
# Host-side (XLA) glue: patch extraction, pooling matrices, weight prep
# --------------------------------------------------------------------------
# TODO(synk): patch extraction (im2col) stays in XLA via
# conv_general_dilated_patches; an in-kernel gather would remove the remaining
# HBM round trip between the two conv stages.
def _patches(x, k, pad):
    """x: (B, C, H, W) -> (B, C*k*k, Ho*Wo); channel-major, filter-minor order
    (matches w.reshape(Cout, Cin*k*k))."""
    p = jax.lax.conv_general_dilated_patches(
        x, filter_shape=(k, k), window_strides=(1, 1),
        padding=[(pad, pad), (pad, pad)],
        dimension_numbers=("NCHW", "OIHW", "NCHW"))
    B, F, Ho, Wo = p.shape
    return p.reshape(B, F, Ho * Wo), Ho, Wo


def _avgpool2x2_matrix(H, W, dtype=jnp.float32):
    """(H*W, (H//2)*(W//2)) matrix implementing AvgPool2d(2, 2) as a matmul."""
    Ho, Wo = H // 2, W // 2
    hw = jnp.arange(H * W)
    col = (hw // W // 2) * Wo + (hw % W) // 2
    onehot = (col[:, None] == jnp.arange(Ho * Wo)[None, :]).astype(dtype)
    return onehot * jnp.asarray(0.25, dtype)


def prepare_params(p, compute_dtype=jnp.float32):
    """One-time prep: flatten conv kernels to (Cout, Cin*k*k), reshape biases
    to (Cout, 1), build constant pooling matrices. Set compute_dtype=bfloat16
    for large-batch MXU throughput (bias/tanh epilogues always run in f32)."""
    cd = compute_dtype
    f32 = jnp.float32
    return {
        "w1": p["conv1_w"].reshape(6, 25).astype(cd),
        "b1": p["conv1_b"].reshape(6, 1).astype(f32),
        "w2": p["conv2_w"].reshape(16, 150).astype(cd),
        "b2": p["conv2_b"].reshape(16, 1).astype(f32),
        "w3": p["conv3_w"].reshape(120, 400).astype(cd),
        "b3": p["conv3_b"].reshape(120, 1).astype(f32),
        "w4": p["fc1_w"].astype(cd),
        "b4": p["fc1_b"].reshape(84, 1).astype(f32),
        "w5": p["fc2_w"].astype(cd),
        "b5": p["fc2_b"].reshape(10, 1).astype(f32),
        "pool1": _avgpool2x2_matrix(28, 28, cd),
        "pool2": _avgpool2x2_matrix(10, 10, cd),
    }


# --------------------------------------------------------------------------
# Model: CustomLeNet5 forward
# --------------------------------------------------------------------------
def lenet5_forward(x, pp):
    """x: (B, 1, 28, 28) NCHW -> logits (B, 10)."""
    B = x.shape[0]
    cd = pp["w1"].dtype

    # Stage 1: conv1(pad=2) + tanh + avgpool2x2 + tanh  (one fused kernel)
    p1, _, _ = _patches(x, 5, 2)                                   # (B, 25, 784)
    a1 = conv_pool_stage(p1.astype(cd), pp["w1"], pp["b1"], pp["pool1"])  # (B, 6, 196)

    # Stage 2: conv2(pad=0) + tanh + avgpool2x2 + tanh  (one fused kernel)
    p2, _, _ = _patches(a1.reshape(B, 6, 14, 14), 5, 0)            # (B, 150, 100)
    a2 = conv_pool_stage(p2.astype(cd), pp["w2"], pp["b2"], pp["pool2"])  # (B, 16, 25)

    # Stage 3: conv3 (5x5 on 5x5 input == dense 400->120, no im2col needed)
    #          + tanh + fc1 + tanh + fc2, fused head, batch on the lane axis.
    xt = a2.reshape(B, 400).T.astype(cd)                           # (400, B)
    logits_t = head_stage(xt, pp["w3"], pp["b3"], pp["w4"], pp["b4"],
                          pp["w5"], pp["b5"])                      # (10, B)
    return logits_t.T                                              # (B, 10)


# --------------------------------------------------------------------------
# Parameter init (PyTorch-default-like uniform) and pure-JAX reference
# --------------------------------------------------------------------------
def init_params(key):
    def uniform(key, shape, fan_in):
        bound = 1.0 / jnp.sqrt(fan_in)
        return jax.random.uniform(key, shape, jnp.float32, -bound, bound)

    keys = jax.random.split(key, 10)
    p = {}
    p["conv1_w"] = uniform(keys[0], (6, 1, 5, 5), 1 * 5 * 5)
    p["conv1_b"] = uniform(keys[1], (6,), 1 * 5 * 5)
    p["conv2_w"] = uniform(keys[2], (16, 6, 5, 5), 6 * 5 * 5)
    p["conv2_b"] = uniform(keys[3], (16,), 6 * 5 * 5)
    p["conv3_w"] = uniform(keys[4], (120, 16, 5, 5), 16 * 5 * 5)
    p["conv3_b"] = uniform(keys[5], (120,), 16 * 5 * 5)
    p["fc1_w"] = uniform(keys[6], (84, 120), 120)
    p["fc1_b"] = uniform(keys[7], (84,), 120)
    p["fc2_w"] = uniform(keys[8], (10, 84), 84)
    p["fc2_b"] = uniform(keys[9], (10,), 84)
    return p


def lenet5_reference(x, p):
    def conv(x, w, b, pad):
        y = jax.lax.conv_general_dilated(
            x, w, window_strides=(1, 1),
            padding=[(pad, pad), (pad, pad)],
            dimension_numbers=("NCHW", "OIHW", "NCHW"))
        return y + b[None, :, None, None]

    def pool(x):
        s = jax.lax.reduce_window(x, 0.0, jax.lax.add,
                                  (1, 1, 2, 2), (1, 1, 2, 2), "VALID")
        return s / 4.0

    x = jnp.tanh(conv(x, p["conv1_w"], p["conv1_b"], 2))
    x = jnp.tanh(pool(x))
    x = jnp.tanh(conv(x, p["conv2_w"], p["conv2_b"], 0))
    x = jnp.tanh(pool(x))
    x = jnp.tanh(conv(x, p["conv3_w"], p["conv3_b"], 0))
    x = x.reshape(x.shape[0], -1)
    x = jnp.tanh(x @ p["fc1_w"].T + p["fc1_b"])
    x = x @ p["fc2_w"].T + p["fc2_b"]
    return x


if __name__ == "__main__":
    key = jax.random.PRNGKey(0)
    k_x, k_p = jax.random.split(key)

    # LeNet-5 requires 28x28 single-channel input (pad=2 -> ... -> 1x1x120)
    x = jax.random.normal(k_x, (2, 1, 28, 28), dtype=jnp.float32)
    params = init_params(k_p)
    prepped = prepare_params(params)   # f32 compute for exact parity with ref

    fwd = jax.jit(lenet5_forward)
    out = jax.block_until_ready(fwd(x, prepped))

    ref = lenet5_reference(x, params)
    assert out.shape == (2, 10)
    err = jnp.max(jnp.abs(out - ref))
    assert jnp.allclose(out, ref, atol=1e-4, rtol=1e-4), f"max abs err = {err}"

    print("KERNEL_OK")
</pallas_src>

<mosaic_0001>
module attributes {stable_mosaic.version = 11 : i64} {
  func.func @_conv_pool_kernel(%arg0: i32, %arg1: memref<1x25x784xf32, #tpu.memory_space<vmem>>, %arg2: memref<6x25xf32, #tpu.memory_space<vmem>>, %arg3: memref<6x1xf32, #tpu.memory_space<vmem>>, %arg4: memref<784x196xf32, #tpu.memory_space<vmem>>, %arg5: memref<1x6x196xf32, #tpu.memory_space<vmem>>) attributes {dimension_semantics = [#tpu.dimension_semantics<parallel>], iteration_bounds = array<i64: 2>, scalar_prefetch = 0 : i64, scratch_operands = 0 : i64, tpu.core_type = #tpu.core_type<tc>, window_params = [{transform_indices = @transform_0, window_bounds = array<i64: 1, 25, 784>}, {pipeline_mode = #tpu.pipeline_mode<synchronous>, transform_indices = @transform_1, window_bounds = array<i64: 6, 25>}, {pipeline_mode = #tpu.pipeline_mode<synchronous>, transform_indices = @transform_2, window_bounds = array<i64: 6, 1>}, {pipeline_mode = #tpu.pipeline_mode<synchronous>, transform_indices = @transform_3, window_bounds = array<i64: 784, 196>}, {transform_indices = @transform_4, window_bounds = array<i64: 1, 6, 196>}]} {
    %c0 = arith.constant 0 : index
    %c0_0 = arith.constant 0 : index
    %0 = vector.load %arg2[%c0, %c0_0] : memref<6x25xf32, #tpu.memory_space<vmem>>, vector<6x25xf32>
    %c0_1 = arith.constant 0 : index
    %c0_2 = arith.constant 0 : index
    %c0_3 = arith.constant 0 : index
    %1 = vector.load %arg1[%c0_1, %c0_2, %c0_3] : memref<1x25x784xf32, #tpu.memory_space<vmem>>, vector<1x25x784xf32>
    %2 = vector.shape_cast %1 : vector<1x25x784xf32> to vector<25x784xf32>
    %cst = arith.constant dense<0.000000e+00> : vector<6x784xf32>
    %3 = tpu.matmul %0, %2, %cst {dimension_numbers = #tpu.dot_dimension_numbers<[1], [0], [0], [1], [0, 0, 1, 1], [], []>} : vector<6x25xf32>, vector<25x784xf32>, vector<6x784xf32> -> vector<6x784xf32>
    %c0_4 = arith.constant 0 : index
    %c0_5 = arith.constant 0 : index
    %4 = vector.load %arg3[%c0_4, %c0_5] : memref<6x1xf32, #tpu.memory_space<vmem>>, vector<6x1xf32>
    %5 = vector.broadcast %4 : vector<6x1xf32> to vector<6x784xf32>
    %6 = arith.addf %3, %5 : vector<6x784xf32>
    %7 = math.tanh %6 : vector<6x784xf32>
    %c0_6 = arith.constant 0 : index
    %c0_7 = arith.constant 0 : index
    %8 = vector.load %arg4[%c0_6, %c0_7] : memref<784x196xf32, #tpu.memory_space<vmem>>, vector<784x196xf32>
    %cst_8 = arith.constant dense<0.000000e+00> : vector<6x196xf32>
    %9 = tpu.matmul %7, %8, %cst_8 {dimension_numbers = #tpu.dot_dimension_numbers<[1], [0], [0], [1], [0, 0, 1, 1], [], []>} : vector<6x784xf32>, vector<784x196xf32>, vector<6x196xf32> -> vector<6x196xf32>
    %10 = math.tanh %9 : vector<6x196xf32>
    %c0_9 = arith.constant 0 : index
    %c0_10 = arith.constant 0 : index
    %c0_11 = arith.constant 0 : index
    %11 = vector.load %arg5[%c0_9, %c0_10, %c0_11] : memref<1x6x196xf32, #tpu.memory_space<vmem>>, vector<1x6x196xf32>
    %12 = vector.shape_cast %11 : vector<1x6x196xf32> to vector<6x196xf32>
    %13 = vector.shape_cast %10 : vector<6x196xf32> to vector<1x6x196xf32>
    tpu.vector_store %arg5[%c0_9, %c0_10, %c0_11], %13 {strides = array<i32>} : memref<1x6x196xf32, #tpu.memory_space<vmem>>, vector<1x6x196xf32>,
    return
  }
  func.func @transform_0(%arg0: i32) -> (i32, i32, i32) {
    %c0_i32 = arith.constant 0 : i32
    %c0_i32_0 = arith.constant 0 : i32
    %c0_i32_1 = arith.constant 0 : i32
    return %arg0, %c0_i32, %c0_i32_0 : i32, i32, i32
  }
  func.func @transform_1(%arg0: i32) -> (i32, i32) {
    %c0_i32 = arith.constant 0 : i32
    %c0_i32_0 = arith.constant 0 : i32
    %c0_i32_1 = arith.constant 0 : i32
    return %c0_i32, %c0_i32_0 : i32, i32
  }
  func.func @transform_2(%arg0: i32) -> (i32, i32) {
    %c0_i32 = arith.constant 0 : i32
    %c0_i32_0 = arith.constant 0 : i32
    %c0_i32_1 = arith.constant 0 : i32
    return %c0_i32, %c0_i32_0 : i32, i32
  }
  func.func @transform_3(%arg0: i32) -> (i32, i32) {
    %c0_i32 = arith.constant 0 : i32
    %c0_i32_0 = arith.constant 0 : i32
    %c0_i32_1 = arith.constant 0 : i32
    return %c0_i32, %c0_i32_0 : i32, i32
  }
  func.func @transform_4(%arg0: i32) -> (i32, i32, i32) {
    %c0_i32 = arith.constant 0 : i32
    %c0_i32_0 = arith.constant 0 : i32
    %c0_i32_1 = arith.constant 0 : i32
    return %arg0, %c0_i32, %c0_i32_0 : i32, i32, i32
  }
}

module attributes {stable_mosaic.version = 11 : i64} {
  func.func @_conv_pool_kernel(%arg0: i32, %arg1: memref<1x150x100xf32, #tpu.memory_space<vmem>>, %arg2: memref<16x150xf32, #tpu.memory_space<vmem>>, %arg3: memref<16x1xf32, #tpu.memory_space<vmem>>, %arg4: memref<100x25xf32, #tpu.memory_space<vmem>>, %arg5: memref<1x16x25xf32, #tpu.memory_space<vmem>>) attributes {dimension_semantics = [#tpu.dimension_semantics<parallel>], iteration_bounds = array<i64: 2>, scalar_prefetch = 0 : i64, scratch_operands = 0 : i64, tpu.core_type = #tpu.core_type<tc>, window_params = [{transform_indices = @transform_0, window_bounds = array<i64: 1, 150, 100>}, {pipeline_mode = #tpu.pipeline_mode<synchronous>, transform_indices = @transform_1, window_bounds = array<i64: 16, 150>}, {pipeline_mode = #tpu.pipeline_mode<synchronous>, transform_indices = @transform_2, window_bounds = array<i64: 16, 1>}, {pipeline_mode = #tpu.pipeline_mode<synchronous>, transform_indices = @transform_3, window_bounds = array<i64: 100, 25>}, {transform_indices = @transform_4, window_bounds = array<i64: 1, 16, 25>}]} {
    %c0 = arith.constant 0 : index
    %c0_0 = arith.constant 0 : index
    %0 = vector.load %arg2[%c0, %c0_0] : memref<16x150xf32, #tpu.memory_space<vmem>>, vector<16x150xf32>
    %c0_1 = arith.constant 0 : index
    %c0_2 = arith.constant 0 : index
    %c0_3 = arith.constant 0 : index
    %1 = vector.load %arg1[%c0_1, %c0_2, %c0_3] : memref<1x150x100xf32, #tpu.memory_space<vmem>>, vector<1x150x100xf32>
    %2 = vector.shape_cast %1 : vector<1x150x100xf32> to vector<150x100xf32>
    %cst = arith.constant dense<0.000000e+00> : vector<16x100xf32>
    %3 = tpu.matmul %0, %2, %cst {dimension_numbers = #tpu.dot_dimension_numbers<[1], [0], [0], [1], [0, 0, 1, 1], [], []>} : vector<16x150xf32>, vector<150x100xf32>, vector<16x100xf32> -> vector<16x100xf32>
    %c0_4 = arith.constant 0 : index
    %c0_5 = arith.constant 0 : index
    %4 = vector.load %arg3[%c0_4, %c0_5] : memref<16x1xf32, #tpu.memory_space<vmem>>, vector<16x1xf32>
    %5 = vector.broadcast %4 : vector<16x1xf32> to vector<16x100xf32>
    %6 = arith.addf %3, %5 : vector<16x100xf32>
    %7 = math.tanh %6 : vector<16x100xf32>
    %c0_6 = arith.constant 0 : index
    %c0_7 = arith.constant 0 : index
    %8 = vector.load %arg4[%c0_6, %c0_7] : memref<100x25xf32, #tpu.memory_space<vmem>>, vector<100x25xf32>
    %cst_8 = arith.constant dense<0.000000e+00> : vector<16x25xf32>
    %9 = tpu.matmul %7, %8, %cst_8 {dimension_numbers = #tpu.dot_dimension_numbers<[1], [0], [0], [1], [0, 0, 1, 1], [], []>} : vector<16x100xf32>, vector<100x25xf32>, vector<16x25xf32> -> vector<16x25xf32>
    %10 = math.tanh %9 : vector<16x25xf32>
    %c0_9 = arith.constant 0 : index
    %c0_10 = arith.constant 0 : index
    %c0_11 = arith.constant 0 : index
    %11 = vector.load %arg5[%c0_9, %c0_10, %c0_11] : memref<1x16x25xf32, #tpu.memory_space<vmem>>, vector<1x16x25xf32>
    %12 = vector.shape_cast %11 : vector<1x16x25xf32> to vector<16x25xf32>
    %13 = vector.shape_cast %10 : vector<16x25xf32> to vector<1x16x25xf32>
    tpu.vector_store %arg5[%c0_9, %c0_10, %c0_11], %13 {strides = array<i32>} : memref<1x16x25xf32, #tpu.memory_space<vmem>>, vector<1x16x25xf32>,
    return
  }
  func.func @transform_0(%arg0: i32) -> (i32, i32, i32) {
    %c0_i32 = arith.constant 0 : i32
    %c0_i32_0 = arith.constant 0 : i32
    %c0_i32_1 = arith.constant 0 : i32
    return %arg0, %c0_i32, %c0_i32_0 : i32, i32, i32
  }
  func.func @transform_1(%arg0: i32) -> (i32, i32) {
    %c0_i32 = arith.constant 0 : i32
    %c0_i32_0 = arith.constant 0 : i32
    %c0_i32_1 = arith.constant 0 : i32
    return %c0_i32, %c0_i32_0 : i32, i32
  }
  func.func @transform_2(%arg0: i32) -> (i32, i32) {
    %c0_i32 = arith.constant 0 : i32
    %c0_i32_0 = arith.constant 0 : i32
    %c0_i32_1 = arith.constant 0 : i32
    return %c0_i32, %c0_i32_0 : i32, i32
  }
  func.func @transform_3(%arg0: i32) -> (i32, i32) {
    %c0_i32 = arith.constant 0 : i32
    %c0_i32_0 = arith.constant 0 : i32
    %c0_i32_1 = arith.constant 0 : i32
    return %c0_i32, %c0_i32_0 : i32, i32
  }
  func.func @transform_4(%arg0: i32) -> (i32, i32, i32) {
    %c0_i32 = arith.constant 0 : i32
    %c0_i32_0 = arith.constant 0 : i32
    %c0_i32_1 = arith.constant 0 : i32
    return %arg0, %c0_i32, %c0_i32_0 : i32, i32, i32
  }
}

module attributes {stable_mosaic.version = 11 : i64} {
  func.func @_head_kernel(%arg0: i32, %arg1: memref<400x2xf32, #tpu.memory_space<vmem>>, %arg2: memref<120x400xf32, #tpu.memory_space<vmem>>, %arg3: memref<120x1xf32, #tpu.memory_space<vmem>>, %arg4: memref<84x120xf32, #tpu.memory_space<vmem>>, %arg5: memref<84x1xf32, #tpu.memory_space<vmem>>, %arg6: memref<10x84xf32, #tpu.memory_space<vmem>>, %arg7: memref<10x1xf32, #tpu.memory_space<vmem>>, %arg8: memref<10x2xf32, #tpu.memory_space<vmem>>) attributes {dimension_semantics = [#tpu.dimension_semantics<parallel>], iteration_bounds = array<i64: 1>, scalar_prefetch = 0 : i64, scratch_operands = 0 : i64, tpu.core_type = #tpu.core_type<tc>, window_params = [{transform_indices = @transform_0, window_bounds = array<i64: 400, 2>}, {pipeline_mode = #tpu.pipeline_mode<synchronous>, transform_indices = @transform_1, window_bounds = array<i64: 120, 400>}, {pipeline_mode = #tpu.pipeline_mode<synchronous>, transform_indices = @transform_2, window_bounds = array<i64: 120, 1>}, {pipeline_mode = #tpu.pipeline_mode<synchronous>, transform_indices = @transform_3, window_bounds = array<i64: 84, 120>}, {pipeline_mode = #tpu.pipeline_mode<synchronous>, transform_indices = @transform_4, window_bounds = array<i64: 84, 1>}, {pipeline_mode = #tpu.pipeline_mode<synchronous>, transform_indices = @transform_5, window_bounds = array<i64: 10, 84>}, {pipeline_mode = #tpu.pipeline_mode<synchronous>, transform_indices = @transform_6, window_bounds = array<i64: 10, 1>}, {transform_indices = @transform_7, window_bounds = array<i64: 10, 2>}]} {
    %c0 = arith.constant 0 : index
    %c0_0 = arith.constant 0 : index
    %0 = vector.load %arg2[%c0, %c0_0] : memref<120x400xf32, #tpu.memory_space<vmem>>, vector<120x400xf32>
    %c0_1 = arith.constant 0 : index
    %c0_2 = arith.constant 0 : index
    %1 = vector.load %arg1[%c0_1, %c0_2] : memref<400x2xf32, #tpu.memory_space<vmem>>, vector<400x2xf32>
    %cst = arith.constant dense<0.000000e+00> : vector<120x2xf32>
    %2 = tpu.matmul %0, %1, %cst {dimension_numbers = #tpu.dot_dimension_numbers<[1], [0], [0], [1], [0, 0, 1, 1], [], []>} : vector<120x400xf32>, vector<400x2xf32>, vector<120x2xf32> -> vector<120x2xf32>
    %c0_3 = arith.constant 0 : index
    %c0_4 = arith.constant 0 : index
    %3 = vector.load %arg3[%c0_3, %c0_4] : memref<120x1xf32, #tpu.memory_space<vmem>>, vector<120x1xf32>
    %4 = vector.broadcast %3 : vector<120x1xf32> to vector<120x2xf32>
    %5 = arith.addf %2, %4 : vector<120x2xf32>
    %6 = math.tanh %5 : vector<120x2xf32>
    %c0_5 = arith.constant 0 : index
    %c0_6 = arith.constant 0 : index
    %7 = vector.load %arg4[%c0_5, %c0_6] : memref<84x120xf32, #tpu.memory_space<vmem>>, vector<84x120xf32>
    %cst_7 = arith.constant dense<0.000000e+00> : vector<84x2xf32>
    %8 = tpu.matmul %7, %6, %cst_7 {dimension_numbers = #tpu.dot_dimension_numbers<[1], [0], [0], [1], [0, 0, 1, 1], [], []>} : vector<84x120xf32>, vector<120x2xf32>, vector<84x2xf32> -> vector<84x2xf32>
    %c0_8 = arith.constant 0 : index
    %c0_9 = arith.constant 0 : index
    %9 = vector.load %arg5[%c0_8, %c0_9] : memref<84x1xf32, #tpu.memory_space<vmem>>, vector<84x1xf32>
    %10 = vector.broadcast %9 : vector<84x1xf32> to vector<84x2xf32>
    %11 = arith.addf %8, %10 : vector<84x2xf32>
    %12 = math.tanh %11 : vector<84x2xf32>
    %c0_10 = arith.constant 0 : index
    %c0_11 = arith.constant 0 : index
    %13 = vector.load %arg6[%c0_10, %c0_11] : memref<10x84xf32, #tpu.memory_space<vmem>>, vector<10x84xf32>
    %cst_12 = arith.constant dense<0.000000e+00> : vector<10x2xf32>
    %14 = tpu.matmul %13, %12, %cst_12 {dimension_numbers = #tpu.dot_dimension_numbers<[1], [0], [0], [1], [0, 0, 1, 1], [], []>} : vector<10x84xf32>, vector<84x2xf32>, vector<10x2xf32> -> vector<10x2xf32>
    %c0_13 = arith.constant 0 : index
    %c0_14 = arith.constant 0 : index
    %15 = vector.load %arg7[%c0_13, %c0_14] : memref<10x1xf32, #tpu.memory_space<vmem>>, vector<10x1xf32>
    %16 = vector.broadcast %15 : vector<10x1xf32> to vector<10x2xf32>
    %17 = arith.addf %14, %16 : vector<10x2xf32>
    %c0_15 = arith.constant 0 : index
    %c0_16 = arith.constant 0 : index
    %18 = vector.load %arg8[%c0_15, %c0_16] : memref<10x2xf32, #tpu.memory_space<vmem>>, vector<10x2xf32>
    tpu.vector_store %arg8[%c0_15, %c0_16], %17 {strides = array<i32>} : memref<10x2xf32, #tpu.memory_space<vmem>>, vector<10x2xf32>,
    return
  }
  func.func @transform_0(%arg0: i32) -> (i32, i32) {
    %c0_i32 = arith.constant 0 : i32
    %c0_i32_0 = arith.constant 0 : i32
    return %c0_i32, %arg0 : i32, i32
  }
  func.func @transform_1(%arg0: i32) -> (i32, i32) {
    %c0_i32 = arith.constant 0 : i32
    %c0_i32_0 = arith.constant 0 : i32
    %c0_i32_1 = arith.constant 0 : i32
    return %c0_i32, %c0_i32_0 : i32, i32
  }
  func.func @transform_2(%arg0: i32) -> (i32, i32) {
    %c0_i32 = arith.constant 0 : i32
    %c0_i32_0 = arith.constant 0 : i32
    %c0_i32_1 = arith.constant 0 : i32
    return %c0_i32, %c0_i32_0 : i32, i32
  }
  func.func @transform_3(%arg0: i32) -> (i32, i32) {
    %c0_i32 = arith.constant 0 : i32
    %c0_i32_0 = arith.constant 0 : i32
    %c0_i32_1 = arith.constant 0 : i32
    return %c0_i32, %c0_i32_0 : i32, i32
  }
  func.func @transform_4(%arg0: i32) -> (i32, i32) {
    %c0_i32 = arith.constant 0 : i32
    %c0_i32_0 = arith.constant 0 : i32
    %c0_i32_1 = arith.constant 0 : i32
    return %c0_i32, %c0_i32_0 : i32, i32
  }
  func.func @transform_5(%arg0: i32) -> (i32, i32) {
    %c0_i32 = arith.constant 0 : i32
    %c0_i32_0 = arith.constant 0 : i32
    %c0_i32_1 = arith.constant 0 : i32
    return %c0_i32, %c0_i32_0 : i32, i32
  }
  func.func @transform_6(%arg0: i32) -> (i32, i32) {
    %c0_i32 = arith.constant 0 : i32
    %c0_i32_0 = arith.constant 0 : i32
    %c0_i32_1 = arith.constant 0 : i32
    return %c0_i32, %c0_i32_0 : i32, i32
  }
  func.func @transform_7(%arg0: i32) -> (i32, i32) {
    %c0_i32 = arith.constant 0 : i32
    %c0_i32_0 = arith.constant 0 : i32
    return %c0_i32, %arg0 : i32, i32
  }
}

</mosaic_0001>

<llo_original>
// kernel: lenet5_forward.3
$region0: #{lenet5_forward.3}
  #allocation0 [shape = 'u32[]', space=smem, size = 0x4, offset = 0x4, fixed_abs, tag = 'smem constant byte address 0x4 - core index']
  #allocation1 [shape = 'u32[144,128]{1,0:T(1,128)}', space=vmem, size = 0x12000, scoped, tag = 'internal scratch']
  %s0 = inlined_call_operand.vmem [shape: f32[2,25,784], index: 0, kind: input, shape index: {}]
  %s1 = inlined_call_operand.vmem [shape: f32[6,25], index: 1, kind: input, shape index: {}]
  %s2 = inlined_call_operand.vmem [shape: f32[6,1], index: 2, kind: input, shape index: {}]
  %s3 = inlined_call_operand.vmem [shape: f32[784,196], index: 3, kind: input, shape index: {}]
  %s4 = inlined_call_operand.vmem [shape: f32[2,6,196], index: 4, kind: output, shape index: {}]
  %s5 = sld [smem:[#allocation0]]
  $region49: #{lenet5_forward.3} parent=0
    _
  %s7 = ssub.s32 1, %s5
  %s8 = scalar_select 0, %s7, %s5
  loop: start=0, step=1, limit=4
  $region2: #{lenet5_forward.3} parent=0 // loop_pre_header
    _
  $region3: #{lenet5_forward.3} parent=0 // loop_header
    %s10 = sphi 0, %s14
    %p11 = scmp.ge.s32.totalorder %s10, 4
    %s20 = sphi 0, %s22
    %s23 = sphi 0, %s20
    %s24 = sphi 0, %s23
    %s40 = sphi 0, %s24
    %s44 = sphi 0, %s44
    %s46 = sphi 0, %s44
    %s47 = sphi 0, %s46
    %s61 = sphi 0, %s47
    %s65 = sphi 0, %s65
    %s67 = sphi 0, %s65
    %s68 = sphi 0, %s67
    %s82 = sphi 0, %s68
    %s86 = sphi 0, %s86
    %s88 = sphi 0, %s86
    %s89 = sphi 0, %s88
    %s103 = sphi 0, %s89
    %s109 = sphi 0, %s111
    %s112 = sphi 0, %s109
    %s113 = sphi 0, %s112
    %s129 = sphi 0, %s113
  $region4: #{lenet5_forward.3} parent=0 // loop_header_branch
    %13 = sbr.rel (%p11) target = $region8
  $region5: #{lenet5_forward.3} parent=0 // loop_body
    %s15 = ssub.s32 %s10, 1
    %s16 = ssub.s32 %s10, 2
    %s17 = sadd.s32 %s10, 1
    %s18 = ssub.s32 %s10, %s17
    %p19 = scmp.eq.s32.totalorder %s18, 0
    %s21 = sadd.s32 %s20, 1
    %s22 = scalar_select %p19, %s20, %s21
    %p25 = pneg %p19
    %p26 = scmp.eq.s32.totalorder %s10, 1
    %p27 = por %p25, %p26
    %p28 = scmp.ne.s32.totalorder %s20, %s23
    %p29 = scmp.eq.s32.totalorder %s10, 0
    %p30 = por %p28, %p29
    %p31 = scmp.ne.s32.totalorder %s20, %s23
    %p32 = scmp.eq.s32.totalorder %s15, 1
    %p33 = por %p31, %p32
    %p34 = scmp.ne.s32.totalorder %s23, %s24
    %p35 = scmp.eq.s32.totalorder %s15, 0
    %p36 = por %p34, %p35
    %p37 = scmp.ne.s32.totalorder %s23, %s24
    %p38 = scmp.eq.s32.totalorder %s16, 1
    %p39 = por %p37, %p38
    %p41 = scmp.ne.s32.totalorder %s24, %s40
    %p42 = scmp.eq.s32.totalorder %s16, 0
    %p43 = por %p41, %p42
    %s45 = sadd.s32 %s44, 1
    %p48 = scmp.eq.s32.totalorder %s10, 1
    %p49 = scmp.ne.s32.totalorder %s44, %s46
    %p50 = scmp.eq.s32.totalorder %s10, 0
    %p51 = por %p49, %p50
    %p52 = scmp.ne.s32.totalorder %s44, %s46
    %p53 = scmp.eq.s32.totalorder %s15, 1
    %p54 = por %p52, %p53
    %p55 = scmp.ne.s32.totalorder %s46, %s47
    %p56 = scmp.eq.s32.totalorder %s15, 0
    %p57 = por %p55, %p56
    %p58 = scmp.ne.s32.totalorder %s46, %s47
    %p59 = scmp.eq.s32.totalorder %s16, 1
    %p60 = por %p58, %p59
    %p62 = scmp.ne.s32.totalorder %s47, %s61
    %p63 = scmp.eq.s32.totalorder %s16, 0
    %p64 = por %p62, %p63
    %s66 = sadd.s32 %s65, 1
    %p69 = scmp.eq.s32.totalorder %s10, 1
    %p70 = scmp.ne.s32.totalorder %s65, %s67
    %p71 = scmp.eq.s32.totalorder %s10, 0
    %p72 = por %p70, %p71
    %p73 = scmp.ne.s32.totalorder %s65, %s67
    %p74 = scmp.eq.s32.totalorder %s15, 1
    %p75 = por %p73, %p74
    %p76 = scmp.ne.s32.totalorder %s67, %s68
    %p77 = scmp.eq.s32.totalorder %s15, 0
    %p78 = por %p76, %p77
    %p79 = scmp.ne.s32.totalorder %s67, %s68
    %p80 = scmp.eq.s32.totalorder %s16, 1
    %p81 = por %p79, %p80
    %p83 = scmp.ne.s32.totalorder %s68, %s82
    %p84 = scmp.eq.s32.totalorder %s16, 0
    %p85 = por %p83, %p84
    %s87 = sadd.s32 %s86, 1
    %p90 = scmp.eq.s32.totalorder %s10, 1
    %p91 = scmp.ne.s32.totalorder %s86, %s88
    %p92 = scmp.eq.s32.totalorder %s10, 0
    %p93 = por %p91, %p92
    %p94 = scmp.ne.s32.totalorder %s86, %s88
    %p95 = scmp.eq.s32.totalorder %s15, 1
    %p96 = por %p94, %p95
    %p97 = scmp.ne.s32.totalorder %s88, %s89
    %p98 = scmp.eq.s32.totalorder %s15, 0
    %p99 = por %p97, %p98
    %p100 = scmp.ne.s32.totalorder %s88, %s89
    %p101 = scmp.eq.s32.totalorder %s16, 1
    %p102 = por %p100, %p101
    %p104 = scmp.ne.s32.totalorder %s89, %s103
    %p105 = scmp.eq.s32.totalorder %s16, 0
    %p106 = por %p104, %p105
    %s107 = ssub.s32 %s10, %s17
    %p108 = scmp.eq.s32.totalorder %s107, 0
    %s110 = sadd.s32 %s109, 1
    %s111 = scalar_select %p108, %s109, %s110
    %p114 = pneg %p108
    %p115 = scmp.eq.s32.totalorder %s10, 1
    %p116 = por %p114, %p115
    %p117 = scmp.ne.s32.totalorder %s109, %s112
    %p118 = scmp.eq.s32.totalorder %s10, 0
    %p119 = por %p117, %p118
    %p120 = scmp.ne.s32.totalorder %s109, %s112
    %p121 = scmp.eq.s32.totalorder %s15, 1
    %p122 = por %p120, %p121
    %p123 = scmp.ne.s32.totalorder %s112, %s113
    %p124 = scmp.eq.s32.totalorder %s15, 0
    %p125 = por %p123, %p124
    %p126 = scmp.ne.s32.totalorder %s112, %s113
    %p127 = scmp.eq.s32.totalorder %s16, 1
    %p128 = por %p126, %p127
    %p130 = scmp.ne.s32.totalorder %s113, %s129
    %p131 = scmp.eq.s32.totalorder %s16, 0
    %p132 = por %p130, %p131
    %p133 = scmp.le.s32.totalorder 1, %s10
    %p134 = scmp.lt.s32.totalorder %s10, 3
    %p135 = pnand %p133, %p134
    %p136 = pneg %p135
    // Predicated region
    $region9: #{lenet5_forward.3} parent=5 // pred_check
      _
    $region10: #{lenet5_forward.3} parent=5 // pred_check_branch
      %138 = sbr.rel (%p135) target = $region12
    $region11: #{lenet5_forward.3} parent=5 // pred_region
      %s139 = ssub.s32 %s10, 1
      // Predicated region
      $region13: #{lenet5_forward.3} parent=11 // pred_check
        %p140 = pneg %p57
      $region14: #{lenet5_forward.3} parent=11 // pred_check_branch
        %142 = sbr.rel (%p140) target = $region16
      $region15: #{lenet5_forward.3} parent=11 // pred_region
        _
      $region16: #{lenet5_forward.3} parent=11 // pred_fallthru
        _
      // Predicated region
      $region17: #{lenet5_forward.3} parent=11 // pred_check
        %p143 = pneg %p78
      $region18: #{lenet5_forward.3} parent=11 // pred_check_branch
        %145 = sbr.rel (%p143) target = $region20
      $region19: #{lenet5_forward.3} parent=11 // pred_region
        _
      $region20: #{lenet5_forward.3} parent=11 // pred_fallthru
        _
      // Predicated region
      $region21: #{lenet5_forward.3} parent=11 // pred_check
        %p146 = pneg %p99
      $region22: #{lenet5_forward.3} parent=11 // pred_check_branch
        %148 = sbr.rel (%p146) target = $region24
      $region23: #{lenet5_forward.3} parent=11 // pred_region
        _
      $region24: #{lenet5_forward.3} parent=11 // pred_fallthru
        _
    $region12: #{lenet5_forward.3} parent=5 // pred_fallthru
      _
    %p149 = scmp.lt.s32.totalorder %s10, 2
    // Predicated region
    $region25: #{lenet5_forward.3} parent=5 // pred_check
      %p150 = pneg %p149
    $region26: #{lenet5_forward.3} parent=5 // pred_check_branch
      %152 = sbr.rel (%p150) target = $region28
    $region27: #{lenet5_forward.3} parent=5 // pred_region
      // Predicated region
      $region29: #{lenet5_forward.3} parent=27 // pred_check
        %p153 = pneg %p30
      $region30: #{lenet5_forward.3} parent=27 // pred_check_branch
        %155 = sbr.rel (%p153) target = $region32
      $region31: #{lenet5_forward.3} parent=27 // pred_region
        %p156 = scmp.lt.s32.totalorder %s10, 1
        %s157 = scalar_select %p156, %s10, 1
        %s158 = smul.addr %s157, 28
        %s159 = smul.addr %s158, 8
        %s160 = scalar_lea.vmem %s0, %s159
      $region32: #{lenet5_forward.3} parent=27 // pred_fallthru
        _
    $region28: #{lenet5_forward.3} parent=5 // pred_fallthru
      _
    %p161 = scmp.le.s32.totalorder 1, %s10
    %p162 = scmp.lt.s32.totalorder %s10, 3
    %p163 = pnand %p161, %p162
    %p164 = pneg %p163
    // Predicated region
    $region33: #{lenet5_forward.3} parent=5 // pred_check
      _
    $region34: #{lenet5_forward.3} parent=5 // pred_check_branch
      %166 = sbr.rel (%p163) target = $region36
    $region35: #{lenet5_forward.3} parent=5 // pred_region
      %s167 = ssub.s32 %s10, 1
      %p168 = scmp.lt.s32.totalorder %s15, 1
      %s169 = scalar_select %p168, %s15, 1
      %s170 = smul.addr %s169, 28
      %s171 = smul.addr %s170, 8
      %s172 = scalar_lea.vmem %s0, %s171
      %p173 = pneg %p36
      %p174 = pneg %p33
      %p175 = pneg %p57
      %p176 = pneg %p54
      %p177 = pneg %p78
      %p178 = pneg %p75
      %p179 = pneg %p99
      %p180 = pneg %p96
      %p181 = pneg %p125
      %p182 = pneg %p122
      %p183 = scmp.lt.s32.totalorder %s15, 1
      %s184 = scalar_select %p183, %s15, 1
      %s185 = smul.addr %s184, 2
      %s186 = smul.addr %s185, 8
      %s187 = scalar_lea.vmem %s4, %s186
      %p188 = scmp.lt.s32.totalorder %s15, 1
      %s189 = scalar_select %p188, %s15, 1
      %s190 = smul.addr %s189, 28
      %s191 = smul.addr %s190, 8
      %s192 = scalar_lea.vmem %s0, %s191
      %p193 = scmp.lt.s32.totalorder %s15, 1
      %s194 = scalar_select %p193, %s15, 1
      %s195 = smul.addr %s194, 2
      %s196 = smul.addr %s195, 8
      %s197 = scalar_lea.vmem %s4, %s196
      %v198 = vld [vmem:[%s1] sm:$0x3f]
      %v199 = vld [vmem:[%s192] sm:$0xff]
      %v200 = vld [vmem:[%s192 + $0x8] sm:$0xff]
      %v201 = vld [vmem:[%s192 + $0x10] sm:$0xff]
      %v202 = vld [vmem:[%s192 + $0x18] sm:$0xff]
      %v203 = vld [vmem:[%s192 + $0x20] sm:$0xff]
      %v204 = vld [vmem:[%s192 + $0x28] sm:$0xff]
      %v205 = vld [vmem:[%s192 + $0x30] sm:$0xff]
      %v206 = vld [vmem:[%s192 + $0x38] sm:$0xff]
      %v207 = vld [vmem:[%s192 + $0x40] sm:$0xff]
      %v208 = vld [vmem:[%s192 + $0x48] sm:$0xff]
      %v209 = vld [vmem:[%s192 + $0x50] sm:$0xff]
      %v210 = vld [vmem:[%s192 + $0x58] sm:$0xff]
      %v211 = vld [vmem:[%s192 + $0x60] sm:$0xff]
      %v212 = vld [vmem:[%s192 + $0x68] sm:$0xff]
      %v213 = vld [vmem:[%s192 + $0x70] sm:$0xff]
      %v214 = vld [vmem:[%s192 + $0x78] sm:$0xff]
      %v215 = vld [vmem:[%s192 + $0x80] sm:$0xff]
      %v216 = vld [vmem:[%s192 + $0x88] sm:$0xff]
      %v217 = vld [vmem:[%s192 + $0x90] sm:$0xff]
      %v218 = vld [vmem:[%s192 + $0x98] sm:$0xff]
      %v219 = vld [vmem:[%s192 + $0xa0] sm:$0xff]
      %v220 = vld [vmem:[%s192 + $0xa8] sm:$0x1]
      %v221 = vld [vmem:[%s192 + $0xb0] sm:$0x1]
      %v222 = vld [vmem:[%s192 + $0xb8] sm:$0x1]
      %v223 = vld [vmem:[%s192 + $0xc0] sm:$0x1]
      %v224 = vld [vmem:[%s192 + $0xc8] sm:$0x1]
      %v225 = vld [vmem:[%s192 + $0xd0] sm:$0x1]
      %v226 = vld [vmem:[%s192 + $0xd8] sm:$0x1]
      %v227 = vld [vmem:[%s2] sm:$0x3f]
      %229 = vset.pattern.permute.xlu0 0
      %230 = vperm.xlu0 %229, %v227
      %v231 = vpop.permute.xlu0 %230
      %vm233 = vcmask 203776
      %v235 = vsel %vm233, %v198, 0
      %vm237 = vcmask 1040384
      %v239 = vsel %vm237, %v220, 0
      %v242 = vsel %vm237, %v221, 0
      %v245 = vsel %vm237, %v222, 0
      %v248 = vsel %vm237, %v223, 0
      %v251 = vsel %vm237, %v224, 0
      %v254 = vsel %vm237, %v225, 0
      %v257 = vsel %vm237, %v226, 0
      %259 = vmatprep.subr.mxu0 %v200
      %260 = vmatpush1.msra.mxu0 %v199
      %261 = vmatprep.subr.mxu0 %v207
      %262 = vmatpush1.msra.mxu0 %v206
      %263 = vmatprep.subr.mxu0 %v214
      %264 = vmatpush1.msra.mxu0 %v213
      %265 = vmatprep.subr.mxu0 %v242
      %266 = vmatpush1.msra.mxu0 %v239
      %267 = vmatprep.subr.mxu0 0.0
      %268 = vmatpush1.msra.mxu0 0.0
      %269 = vmatprep.subr.mxu0 0.0
      %270 = vmatpush1.msra.mxu0 0.0
      %271 = vmatprep.subr.mxu0 0.0
      %272 = vmatpush1.msra.mxu0 0.0
      %273 = vmatprep.subr.mxu0 0.0
      %274 = vmatpush1.msra.mxu0 0.0
      %275 = vmatprep.subr.mxu0 0.0
      %276 = vmatpush1.msra.mxu0 0.0
      %277 = vmatprep.subr.mxu0 0.0
      %278 = vmatpush1.msra.mxu0 0.0
      %279 = vmatprep.subr.mxu0 0.0
      %280 = vmatpush1.msra.mxu0 0.0
      %281 = vmatprep.subr.mxu0 0.0
      %282 = vmatpush1.msra.mxu0 0.0
      %283 = vmatprep.subr.mxu0 0.0
      %284 = vmatpush1.msra.mxu0 0.0
      %285 = vmatprep.subr.mxu0 0.0
      %286 = vmatpush1.msra.mxu0 0.0
      %287 = vmatprep.subr.mxu0 0.0
      %288 = vmatpush1.msra.mxu0 0.0
      %289 = vmatprep.subr.mxu0 0.0
      %290 = vmatpush1.msra.mxu0 0.0
      %291 = vmatprep.subr.mxu0 0.0
      %292 = vmatpush1.msra.mxu0 0.0
      %293 = vmatprep.subr.mxu0 0.0
      %294 = vmatpush1.msra.mxu0 0.0
      %295 = vmatprep.subr.mxu0 0.0
      %296 = vmatpush1.msra.mxu0 0.0
      %297 = vmatprep.subr.mxu0 0.0
      %298 = vmatpush1.msra.mxu0 0.0
      %299 = vmatprep.subr.mxu0 0.0
      %300 = vmatpush1.msra.mxu0 0.0
      %301 = vmatprep.subr.mxu0 0.0
      %302 = vmatpush1.msra.mxu0 0.0
      %303 = vmatprep.subr.mxu0 0.0
      %304 = vmatpush1.msra.mxu0 0.0
      %305 = vmatprep.subr.mxu0 0.0
      %306 = vmatpush1.msra.mxu0 0.0
      %307 = vmatprep.subr.mxu0 0.0
      %308 = vmatpush1.msra.mxu0 0.0
      %309 = vmatprep.subr.mxu0 0.0
      %310 = vmatpush1.msra.mxu0 0.0
      %311 = vmatprep.subr.mxu0 0.0
      %312 = vmatpush1.msra.mxu0 0.0
      %313 = vmatprep.subr.mxu0 0.0
      %314 = vmatpush1.msra.mxu0 0.0
      %315 = vmatprep.subr.mxu0 0.0
      %316 = vmatpush1.msra.mxu0 0.0
      %317 = vmatprep.subr.mxu0 0.0
      %318 = vmatpush1.msra.mxu0 0.0
      %319 = vmatprep.subr.mxu0 0.0
      %320 = vmatpush1.msra.mxu0 0.0
      %321 = vmatprep.subr.mxu0 0.0
      %322 = vmatpush1.msra.mxu0 0.0
      %323 = vmatprep.mubr.f32.mxu0 0.0
      %324 = vmatmul.mubr.f32.gmra.mrb[0].mxu0 %v235
      %v325 = vpop.f32.mrb[0].mxu0
      %v326 = vadd.f32 %v231, %v325
      %v327 = vpop.f32.mrb[0].mxu0
      %v328 = vadd.f32 %v231, %v327
      %329 = vdwg.mxu0
      %330 = vmatprep.subr.mxu0 %v202
      %331 = vmatpush1.msra.mxu0 %v201
      %332 = vmatprep.subr.mxu0 %v209
      %333 = vmatpush1.msra.mxu0 %v208
      %334 = vmatprep.subr.mxu0 %v216
      %335 = vmatpush1.msra.mxu0 %v215
      %336 = vmatprep.subr.mxu0 %v248
      %337 = vmatpush1.msra.mxu0 %v245
      %338 = vmatprep.subr.mxu0 0.0
      %339 = vmatpush1.msra.mxu0 0.0
      %340 = vmatprep.subr.mxu0 0.0
      %341 = vmatpush1.msra.mxu0 0.0
      %342 = vmatprep.subr.mxu0 0.0
      %343 = vmatpush1.msra.mxu0 0.0
      %344 = vmatprep.subr.mxu0 0.0
      %345 = vmatpush1.msra.mxu0 0.0
      %346 = vmatprep.subr.mxu0 0.0
      %347 = vmatpush1.msra.mxu0 0.0
      %348 = vmatprep.subr.mxu0 0.0
      %349 = vmatpush1.msra.mxu0 0.0
      %350 = vmatprep.subr.mxu0 0.0
      %351 = vmatpush1.msra.mxu0 0.0
      %352 = vmatprep.subr.mxu0 0.0
      %353 = vmatpush1.msra.mxu0 0.0
      %354 = vmatprep.subr.mxu0 0.0
      %355 = vmatpush1.msra.mxu0 0.0
      %356 = vmatprep.subr.mxu0 0.0
      %357 = vmatpush1.msra.mxu0 0.0
      %358 = vmatprep.subr.mxu0 0.0
      %359 = vmatpush1.msra.mxu0 0.0
      %360 = vmatprep.subr.mxu0 0.0
      %361 = vmatpush1.msra.mxu0 0.0
      %362 = vmatprep.subr.mxu0 0.0
      %363 = vmatpush1.msra.mxu0 0.0
      %364 = vmatprep.subr.mxu0 0.0
      %365 = vmatpush1.msra.mxu0 0.0
      %366 = vmatprep.subr.mxu0 0.0
      %367 = vmatpush1.msra.mxu0 0.0
      %368 = vmatprep.subr.mxu0 0.0
      %369 = vmatpush1.msra.mxu0 0.0
      %370 = vmatprep.subr.mxu0 0.0
      %371 = vmatpush1.msra.mxu0 0.0
      %372 = vmatprep.subr.mxu0 0.0
      %373 = vmatpush1.msra.mxu0 0.0
      %374 = vmatprep.subr.mxu0 0.0
      %375 = vmatpush1.msra.mxu0 0.0
      %376 = vmatprep.subr.mxu0 0.0
      %377 = vmatpush1.msra.mxu0 0.0
      %378 = vmatprep.subr.mxu0 0.0
      %379 = vmatpush1.msra.mxu0 0.0
      %380 = vmatprep.subr.mxu0 0.0
      %381 = vmatpush1.msra.mxu0 0.0
      %382 = vmatprep.subr.mxu0 0.0
      %383 = vmatpush1.msra.mxu0 0.0
      %384 = vmatprep.subr.mxu0 0.0
      %385 = vmatpush1.msra.mxu0 0.0
      %386 = vmatprep.subr.mxu0 0.0
      %387 = vmatpush1.msra.mxu0 0.0
      %388 = vmatprep.subr.mxu0 0.0
      %389 = vmatpush1.msra.mxu0 0.0
      %390 = vmatprep.subr.mxu0 0.0
      %391 = vmatpush1.msra.mxu0 0.0
      %392 = vmatprep.subr.mxu0 0.0
      %393 = vmatpush1.msra.mxu0 0.0
      %394 = vmatprep.mubr.f32.mxu0 0.0
      %395 = vmatmul.mubr.f32.gmra.mrb[0].mxu0 %v235
      %v396 = vpop.f32.mrb[0].mxu0
      %v397 = vadd.f32 %v231, %v396
      %v398 = vpop.f32.mrb[0].mxu0
      %v399 = vadd.f32 %v231, %v398
      %400 = vdwg.mxu0
      %401 = vmatprep.subr.mxu0 %v204
      %402 = vmatpush1.msra.mxu0 %v203
      %403 = vmatprep.subr.mxu0 %v211
      %404 = vmatpush1.msra.mxu0 %v210
      %405 = vmatprep.subr.mxu0 %v218
      %406 = vmatpush1.msra.mxu0 %v217
      %407 = vmatprep.subr.mxu0 %v254
      %408 = vmatpush1.msra.mxu0 %v251
      %409 = vmatprep.subr.mxu0 0.0
      %410 = vmatpush1.msra.mxu0 0.0
      %411 = vmatprep.subr.mxu0 0.0
      %412 = vmatpush1.msra.mxu0 0.0
      %413 = vmatprep.subr.mxu0 0.0
      %414 = vmatpush1.msra.mxu0 0.0
      %415 = vmatprep.subr.mxu0 0.0
      %416 = vmatpush1.msra.mxu0 0.0
      %417 = vmatprep.subr.mxu0 0.0
      %418 = vmatpush1.msra.mxu0 0.0
      %419 = vmatprep.subr.mxu0 0.0
      %420 = vmatpush1.msra.mxu0 0.0
      %421 = vmatprep.subr.mxu0 0.0
      %422 = vmatpush1.msra.mxu0 0.0
      %423 = vmatprep.subr.mxu0 0.0
      %424 = vmatpush1.msra.mxu0 0.0
      %425 = vmatprep.subr.mxu0 0.0
      %426 = vmatpush1.msra.mxu0 0.0
      %427 = vmatprep.subr.mxu0 0.0
      %428 = vmatpush1.msra.mxu0 0.0
      %429 = vmatprep.subr.mxu0 0.0
      %430 = vmatpush1.msra.mxu0 0.0
      %431 = vmatprep.subr.mxu0 0.0
      %432 = vmatpush1.msra.mxu0 0.0
      %433 = vmatprep.subr.mxu0 0.0
      %434 = vmatpush1.msra.mxu0 0.0
      %435 = vmatprep.subr.mxu0 0.0
      %436 = vmatpush1.msra.mxu0 0.0
      %437 = vmatprep.subr.mxu0 0.0
      %438 = vmatpush1.msra.mxu0 0.0
      %439 = vmatprep.subr.mxu0 0.0
      %440 = vmatpush1.msra.mxu0 0.0
      %441 = vmatprep.subr.mxu0 0.0
      %442 = vmatpush1.msra.mxu0 0.0
      %443 = vmatprep.subr.mxu0 0.0
      %444 = vmatpush1.msra.mxu0 0.0
      %445 = vmatprep.subr.mxu0 0.0
      %446 = vmatpush1.msra.mxu0 0.0
      %447 = vmatprep.subr.mxu0 0.0
      %448 = vmatpush1.msra.mxu0 0.0
      %449 = vmatprep.subr.mxu0 0.0
      %450 = vmatpush1.msra.mxu0 0.0
      %451 = vmatprep.subr.mxu0 0.0
      %452 = vmatpush1.msra.mxu0 0.0
      %453 = vmatprep.subr.mxu0 0.0
      %454 = vmatpush1.msra.mxu0 0.0
      %455 = vmatprep.subr.mxu0 0.0
      %456 = vmatpush1.msra.mxu0 0.0
      %457 = vmatprep.subr.mxu0 0.0
      %458 = vmatpush1.msra.mxu0 0.0
      %459 = vmatprep.subr.mxu0 0.0
      %460 = vmatpush1.msra.mxu0 0.0
      %461 = vmatprep.subr.mxu0 0.0
      %462 = vmatpush1.msra.mxu0 0.0
      %463 = vmatprep.subr.mxu0 0.0
      %464 = vmatpush1.msra.mxu0 0.0
      %465 = vmatprep.mubr.f32.mxu0 0.0
      %466 = vmatmul.mubr.f32.gmra.mrb[0].mxu0 %v235
      %v467 = vpop.f32.mrb[0].mxu0
      %v468 = vadd.f32 %v231, %v467
      %v469 = vpop.f32.mrb[0].mxu0
      %v470 = vadd.f32 %v231, %v469
      %471 = vdwg.mxu0
      %472 = vmatprep.subr.mxu0 0.0
      %473 = vmatpush1.msra.mxu0 %v205
      %474 = vmatprep.subr.mxu0 0.0
      %475 = vmatpush1.msra.mxu0 %v212
      %476 = vmatprep.subr.mxu0 0.0
      %477 = vmatpush1.msra.mxu0 %v219
      %478 = vmatprep.subr.mxu0 0.0
      %479 = vmatpush1.msra.mxu0 %v257
      %480 = vmatprep.subr.mxu0 0.0
      %481 = vmatpush1.msra.mxu0 0.0
      %482 = vmatprep.subr.mxu0 0.0
      %483 = vmatpush1.msra.mxu0 0.0
      %484 = vmatprep.subr.mxu0 0.0
      %485 = vmatpush1.msra.mxu0 0.0
      %486 = vmatprep.subr.mxu0 0.0
      %487 = vmatpush1.msra.mxu0 0.0
      %488 = vmatprep.subr.mxu0 0.0
      %489 = vmatpush1.msra.mxu0 0.0
      %490 = vmatprep.subr.mxu0 0.0
      %491 = vmatpush1.msra.mxu0 0.0
      %492 = vmatprep.subr.mxu0 0.0
      %493 = vmatpush1.msra.mxu0 0.0
      %494 = vmatprep.subr.mxu0 0.0
      %495 = vmatpush1.msra.mxu0 0.0
      %496 = vmatprep.subr.mxu0 0.0
      %497 = vmatpush1.msra.mxu0 0.0
      %498 = vmatprep.subr.mxu0 0.0
      %499 = vmatpush1.msra.mxu0 0.0
      %500 = vmatprep.subr.mxu0 0.0
      %501 = vmatpush1.msra.mxu0 0.0
      %502 = vmatprep.subr.mxu0 0.0
      %503 = vmatpush1.msra.mxu0 0.0
      %504 = vmatprep.subr.mxu0 0.0
      %505 = vmatpush1.msra.mxu0 0.0
      %506 = vmatprep.subr.mxu0 0.0
      %507 = vmatpush1.msra.mxu0 0.0
      %508 = vmatprep.subr.mxu0 0.0
      %509 = vmatpush1.msra.mxu0 0.0
      %510 = vmatprep.subr.mxu0 0.0
      %511 = vmatpush1.msra.mxu0 0.0
      %512 = vmatprep.subr.mxu0 0.0
      %513 = vmatpush1.msra.mxu0 0.0
      %514 = vmatprep.subr.mxu0 0.0
      %515 = vmatpush1.msra.mxu0 0.0
      %516 = vmatprep.subr.mxu0 0.0
      %517 = vmatpush1.msra.mxu0 0.0
      %518 = vmatprep.subr.mxu0 0.0
      %519 = vmatpush1.msra.mxu0 0.0
      %520 = vmatprep.subr.mxu0 0.0
      %521 = vmatpush1.msra.mxu0 0.0
      %522 = vmatprep.subr.mxu0 0.0
      %523 = vmatpush1.msra.mxu0 0.0
      %524 = vmatprep.subr.mxu0 0.0
      %525 = vmatpush1.msra.mxu0 0.0
      %526 = vmatprep.subr.mxu0 0.0
      %527 = vmatpush1.msra.mxu0 0.0
      %528 = vmatprep.subr.mxu0 0.0
      %529 = vmatpush1.msra.mxu0 0.0
      %530 = vmatprep.subr.mxu0 0.0
      %531 = vmatpush1.msra.mxu0 0.0
      %532 = vmatprep.subr.mxu0 0.0
      %533 = vmatpush1.msra.mxu0 0.0
      %534 = vmatprep.subr.mxu0 0.0
      %535 = vmatpush1.msra.mxu0 0.0
      %536 = vmatprep.mubr.f32.mxu0 0.0
      %537 = vmatmul.mubr.f32.gmra.mrb[0].mxu0 %v235
      %v538 = vpop.f32.mrb[0].mxu0
      %v539 = vadd.f32 %v231, %v538
      %v540 = vpop.f32.mrb[0].mxu0
      %541 = vdwg.mxu0
      %v542 = vtanh.pop %v326
      %v543 = vtanh.pop %v328
      %v544 = vtanh.pop %v397
      %v545 = vtanh.pop %v399
      %v546 = vtanh.pop %v468
      %v547 = vtanh.pop %v470
      %v548 = vtanh.pop %v539
      %v549 = vld [vmem:[%s3] sm:$0xff]
      %v550 = vld [vmem:[%s3 + $0x8] sm:$0xff]
      %v551 = vld [vmem:[%s3 + $0x10] sm:$0xff]
      %v552 = vld [vmem:[%s3 + $0x18] sm:$0xff]
      %v553 = vld [vmem:[%s3 + $0x20] sm:$0xff]
      %v554 = vld [vmem:[%s3 + $0x28] sm:$0xff]
      %v555 = vld [vmem:[%s3 + $0x30] sm:$0xff]
      %v556 = vld [vmem:[%s3 + $0x38] sm:$0xff]
      %v557 = vld [vmem:[%s3 + $0x40] sm:$0xff]
      %v558 = vld [vmem:[%s3 + $0x48] sm:$0xff]
      %v559 = vld [vmem:[%s3 + $0x50] sm:$0xff]
      %v560 = vld [vmem:[%s3 + $0x58] sm:$0xff]
      %v561 = vld [vmem:[%s3 + $0x60] sm:$0xff]
      %v562 = vld [vmem:[%s3 + $0x68] sm:$0xff]
      %v563 = vld [vmem:[%s3 + $0x70] sm:$0xff]
      %v564 = vld [vmem:[%s3 + $0x78] sm:$0xff]
      %v565 = vld [vmem:[%s3 + $0x80] sm:$0xff]
      %v566 = vld [vmem:[%s3 + $0x88] sm:$0xff]
      %v567 = vld [vmem:[%s3 + $0x90] sm:$0xff]
      %v568 = vld [vmem:[%s3 + $0x98] sm:$0xff]
      %v569 = vld [vmem:[%s3 + $0xa0] sm:$0xff]
      %v570 = vld [vmem:[%s3 + $0xa8] sm:$0xff]
      %v571 = vld [vmem:[%s3 + $0xb0] sm:$0xff]
      %v572 = vld [vmem:[%s3 + $0xb8] sm:$0xff]
      %v573 = vld [vmem:[%s3 + $0xc0] sm:$0xff]
      %v574 = vld [vmem:[%s3 + $0xc8] sm:$0xff]
      %v575 = vld [vmem:[%s3 + $0xd0] sm:$0xff]
      %v576 = vld [vmem:[%s3 + $0xd8] sm:$0xff]
      %v577 = vld [vmem:[%s3 + $0xe0] sm:$0xff]
      %v578 = vld [vmem:[%s3 + $0xe8] sm:$0xff]
      %v579 = vld [vmem:[%s3 + $0xf0] sm:$0xff]
      %v580 = vld [vmem:[%s3 + $0xf8] sm:$0xff]
      %v581 = vld [vmem:[%s3 + $0x100] sm:$0xff]
      %v582 = vld [vmem:[%s3 + $0x108] sm:$0xff]
      %v583 = vld [vmem:[%s3 + $0x110] sm:$0xff]
      %v584 = vld [vmem:[%s3 + $0x118] sm:$0xff]
      %v585 = vld [vmem:[%s3 + $0x120] sm:$0xff]
      %v586 = vld [vmem:[%s3 + $0x128] sm:$0xff]
      %v587 = vld [vmem:[%s3 + $0x130] sm:$0xff]
      %v588 = vld [vmem:[%s3 + $0x138] sm:$0xff]
      %v589 = vld [vmem:[%s3 + $0x140] sm:$0xff]
      %v590 = vld [vmem:[%s3 + $0x148] sm:$0xff]
      %v591 = vld [vmem:[%s3 + $0x150] sm:$0xff]
      %v592 = vld [vmem:[%s3 + $0x158] sm:$0xff]
      %v593 = vld [vmem:[%s3 + $0x160] sm:$0xff]
      %v594 = vld [vmem:[%s3 + $0x168] sm:$0xff]
      %v595 = vld [vmem:[%s3 + $0x170] sm:$0xff]
      %v596 = vld [vmem:[%s3 + $0x178] sm:$0xff]
      %v597 = vld [vmem:[%s3 + $0x180] sm:$0xff]
      %v598 = vld [vmem:[%s3 + $0x188] sm:$0xff]
      %v599 = vld [vmem:[%s3 + $0x190] sm:$0xff]
      %v600 = vld [vmem:[%s3 + $0x198] sm:$0xff]
      %v601 = vld [vmem:[%s3 + $0x1a0] sm:$0xff]
      %v602 = vld [vmem:[%s3 + $0x1a8] sm:$0xff]
      %v603 = vld [vmem:[%s3 + $0x1b0] sm:$0xff]
      %v604 = vld [vmem:[%s3 + $0x1b8] sm:$0xff]
      %v605 = vld [vmem:[%s3 + $0x1c0] sm:$0xff]
      %v606 = vld [vmem:[%s3 + $0x1c8] sm:$0xff]
      %v607 = vld [vmem:[%s3 + $0x1d0] sm:$0xff]
      %v608 = vld [vmem:[%s3 + $0x1d8] sm:$0xff]
      %v609 = vld [vmem:[%s3 + $0x1e0] sm:$0xff]
      %v610 = vld [vmem:[%s3 + $0x1e8] sm:$0xff]
      %v611 = vld [vmem:[%s3 + $0x1f0] sm:$0xff]
      %v612 = vld [vmem:[%s3 + $0x1f8] sm:$0xff]
      %v613 = vld [vmem:[%s3 + $0x200] sm:$0xff]
      %v614 = vld [vmem:[%s3 + $0x208] sm:$0xff]
      %v615 = vld [vmem:[%s3 + $0x210] sm:$0xff]
      %v616 = vld [vmem:[%s3 + $0x218] sm:$0xff]
      %v617 = vld [vmem:[%s3 + $0x220] sm:$0xff]
      %v618 = vld [vmem:[%s3 + $0x228] sm:$0xff]
      %v619 = vld [vmem:[%s3 + $0x230] sm:$0xff]
      %v620 = vld [vmem:[%s3 + $0x238] sm:$0xff]
      %v621 = vld [vmem:[%s3 + $0x240] sm:$0xff]
      %v622 = vld [vmem:[%s3 + $0x248] sm:$0xff]
      %v623 = vld [vmem:[%s3 + $0x250] sm:$0xff]
      %v624 = vld [vmem:[%s3 + $0x258] sm:$0xff]
      %v625 = vld [vmem:[%s3 + $0x260] sm:$0xff]
      %v626 = vld [vmem:[%s3 + $0x268] sm:$0xff]
      %v627 = vld [vmem:[%s3 + $0x270] sm:$0xff]
      %v628 = vld [vmem:[%s3 + $0x278] sm:$0xff]
      %v629 = vld [vmem:[%s3 + $0x280] sm:$0xff]
      %v630 = vld [vmem:[%s3 + $0x288] sm:$0xff]
      %v631 = vld [vmem:[%s3 + $0x290] sm:$0xff]
      %v632 = vld [vmem:[%s3 + $0x298] sm:$0xff]
      %v633 = vld [vmem:[%s3 + $0x2a0] sm:$0xff]
      %v634 = vld [vmem:[%s3 + $0x2a8] sm:$0xff]
      %v635 = vld [vmem:[%s3 + $0x2b0] sm:$0xff]
      %v636 = vld [vmem:[%s3 + $0x2b8] sm:$0xff]
      %v637 = vld [vmem:[%s3 + $0x2c0] sm:$0xff]
      %v638 = vld [vmem:[%s3 + $0x2c8] sm:$0xff]
      %v639 = vld [vmem:[%s3 + $0x2d0] sm:$0xff]
      %v640 = vld [vmem:[%s3 + $0x2d8] sm:$0xff]
      %v641 = vld [vmem:[%s3 + $0x2e0] sm:$0xff]
      %v642 = vld [vmem:[%s3 + $0x2e8] sm:$0xff]
      %v643 = vld [vmem:[%s3 + $0x2f0] sm:$0xff]
      %v644 = vld [vmem:[%s3 + $0x2f8] sm:$0xff]
      %v645 = vld [vmem:[%s3 + $0x300] sm:$0xff]
      %v646 = vld [vmem:[%s3 + $0x308] sm:$0xff]
      %v647 = vld [vmem:[%s3 + $0x310] sm:$0xff]
      %v648 = vld [vmem:[%s3 + $0x318] sm:$0xff]
      %v649 = vld [vmem:[%s3 + $0x320] sm:$0xff]
      %v650 = vld [vmem:[%s3 + $0x328] sm:$0xff]
      %v651 = vld [vmem:[%s3 + $0x330] sm:$0xff]
      %v652 = vld [vmem:[%s3 + $0x338] sm:$0xff]
      %v653 = vld [vmem:[%s3 + $0x340] sm:$0xff]
      %v654 = vld [vmem:[%s3 + $0x348] sm:$0xff]
      %v655 = vld [vmem:[%s3 + $0x350] sm:$0xff]
      %v656 = vld [vmem:[%s3 + $0x358] sm:$0xff]
      %v657 = vld [vmem:[%s3 + $0x360] sm:$0xff]
      %v658 = vld [vmem:[%s3 + $0x368] sm:$0xff]
      %v659 = vld [vmem:[%s3 + $0x370] sm:$0xff]
      %v660 = vld [vmem:[%s3 + $0x378] sm:$0xff]
      %v661 = vld [vmem:[%s3 + $0x380] sm:$0xff]
      %v662 = vld [vmem:[%s3 + $0x388] sm:$0xff]
      %v663 = vld [vmem:[%s3 + $0x390] sm:$0xff]
      %v664 = vld [vmem:[%s3 + $0x398] sm:$0xff]
      %v665 = vld [vmem:[%s3 + $0x3a0] sm:$0xff]
      %v666 = vld [vmem:[%s3 + $0x3a8] sm:$0xff]
      %v667 = vld [vmem:[%s3 + $0x3b0] sm:$0xff]
      %v668 = vld [vmem:[%s3 + $0x3b8] sm:$0xff]
      %v669 = vld [vmem:[%s3 + $0x3c0] sm:$0xff]
      %v670 = vld [vmem:[%s3 + $0x3c8] sm:$0xff]
      %v671 = vld [vmem:[%s3 + $0x3d0] sm:$0xff]
      %v672 = vld [vmem:[%s3 + $0x3d8] sm:$0xff]
      %v673 = vld [vmem:[%s3 + $0x3e0] sm:$0xff]
      %v674 = vld [vmem:[%s3 + $0x3e8] sm:$0xff]
      %v675 = vld [vmem:[%s3 + $0x3f0] sm:$0xff]
      %v676 = vld [vmem:[%s3 + $0x3f8] sm:$0xff]
      %v677 = vld [vmem:[%s3 + $0x400] sm:$0xff]
      %v678 = vld [vmem:[%s3 + $0x408] sm:$0xff]
      %v679 = vld [vmem:[%s3 + $0x410] sm:$0xff]
      %v680 = vld [vmem:[%s3 + $0x418] sm:$0xff]
      %v681 = vld [vmem:[%s3 + $0x420] sm:$0xff]
      %v682 = vld [vmem:[%s3 + $0x428] sm:$0xff]
      %v683 = vld [vmem:[%s3 + $0x430] sm:$0xff]
      %v684 = vld [vmem:[%s3 + $0x438] sm:$0xff]
      %v685 = vld [vmem:[%s3 + $0x440] sm:$0xff]
      %v686 = vld [vmem:[%s3 + $0x448] sm:$0xff]
      %v687 = vld [vmem:[%s3 + $0x450] sm:$0xff]
      %v688 = vld [vmem:[%s3 + $0x458] sm:$0xff]
      %v689 = vld [vmem:[%s3 + $0x460] sm:$0xff]
      %v690 = vld [vmem:[%s3 + $0x468] sm:$0xff]
      %v691 = vld [vmem:[%s3 + $0x470] sm:$0xff]
      %v692 = vld [vmem:[%s3 + $0x478] sm:$0xff]
      %v693 = vld [vmem:[%s3 + $0x480] sm:$0xff]
      %v694 = vld [vmem:[%s3 + $0x488] sm:$0xff]
      %v695 = vld [vmem:[%s3 + $0x490] sm:$0xff]
      %v696 = vld [vmem:[%s3 + $0x498] sm:$0xff]
      %v697 = vld [vmem:[%s3 + $0x4a0] sm:$0xff]
      %v698 = vld [vmem:[%s3 + $0x4a8] sm:$0xff]
      %v699 = vld [vmem:[%s3 + $0x4b0] sm:$0xff]
      %v700 = vld [vmem:[%s3 + $0x4b8] sm:$0xff]
      %v701 = vld [vmem:[%s3 + $0x4c0] sm:$0xff]
      %v702 = vld [vmem:[%s3 + $0x4c8] sm:$0xff]
      %v703 = vld [vmem:[%s3 + $0x4d0] sm:$0xff]
      %v704 = vld [vmem:[%s3 + $0x4d8] sm:$0xff]
      %v705 = vld [vmem:[%s3 + $0x4e0] sm:$0xff]
      %v706 = vld [vmem:[%s3 + $0x4e8] sm:$0xff]
      %v707 = vld [vmem:[%s3 + $0x4f0] sm:$0xff]
      %v708 = vld [vmem:[%s3 + $0x4f8] sm:$0xff]
      %v709 = vld [vmem:[%s3 + $0x500] sm:$0xff]
      %v710 = vld [vmem:[%s3 + $0x508] sm:$0xff]
      %v711 = vld [vmem:[%s3 + $0x510] sm:$0xff]
      %v712 = vld [vmem:[%s3 + $0x518] sm:$0xff]
      %v713 = vld [vmem:[%s3 + $0x520] sm:$0xff]
      %v714 = vld [vmem:[%s3 + $0x528] sm:$0xff]
      %v715 = vld [vmem:[%s3 + $0x530] sm:$0xff]
      %v716 = vld [vmem:[%s3 + $0x538] sm:$0xff]
      %v717 = vld [vmem:[%s3 + $0x540] sm:$0xff]
      %v718 = vld [vmem:[%s3 + $0x548] sm:$0xff]
      %v719 = vld [vmem:[%s3 + $0x550] sm:$0xff]
      %v720 = vld [vmem:[%s3 + $0x558] sm:$0xff]
      %v721 = vld [vmem:[%s3 + $0x560] sm:$0xff]
      %v722 = vld [vmem:[%s3 + $0x568] sm:$0xff]
      %v723 = vld [vmem:[%s3 + $0x570] sm:$0xff]
      %v724 = vld [vmem:[%s3 + $0x578] sm:$0xff]
      %v725 = vld [vmem:[%s3 + $0x580] sm:$0xff]
      %v726 = vld [vmem:[%s3 + $0x588] sm:$0xff]
      %v727 = vld [vmem:[%s3 + $0x590] sm:$0xff]
      %v728 = vld [vmem:[%s3 + $0x598] sm:$0xff]
      %v729 = vld [vmem:[%s3 + $0x5a0] sm:$0xff]
      %v730 = vld [vmem:[%s3 + $0x5a8] sm:$0xff]
      %v731 = vld [vmem:[%s3 + $0x5b0] sm:$0xff]
      %v732 = vld [vmem:[%s3 + $0x5b8] sm:$0xff]
      %v733 = vld [vmem:[%s3 + $0x5c0] sm:$0xff]
      %v734 = vld [vmem:[%s3 + $0x5c8] sm:$0xff]
      %v735 = vld [vmem:[%s3 + $0x5d0] sm:$0xff]
      %v736 = vld [vmem:[%s3 + $0x5d8] sm:$0xff]
      %v737 = vld [vmem:[%s3 + $0x5e0] sm:$0xff]
      %v738 = vld [vmem:[%s3 + $0x5e8] sm:$0xff]
      %v739 = vld [vmem:[%s3 + $0x5f0] sm:$0xff]
      %v740 = vld [vmem:[%s3 + $0x5f8] sm:$0xff]
      %v741 = vld [vmem:[%s3 + $0x600] sm:$0xff]
      %v742 = vld [vmem:[%s3 + $0x608] sm:$0xff]
      %v743 = vld [vmem:[%s3 + $0x610] sm:$0xff]
      %v744 = vld [vmem:[%s3 + $0x618] sm:$0xff]
      %vm745 = vcmask 130048
      %v747 = vsel %vm745, %v548, 0
      %749 = vmatprep.subr.mxu0 %v550
      %750 = vmatpush1.msra.mxu0 %v549
      %751 = vmatprep.subr.mxu0 %v552
      %752 = vmatpush1.msra.mxu0 %v551
      %753 = vmatprep.subr.mxu0 %v554
      %754 = vmatpush1.msra.mxu0 %v553
      %755 = vmatprep.subr.mxu0 %v556
      %756 = vmatpush1.msra.mxu0 %v555
      %757 = vmatprep.subr.mxu0 %v558
      %758 = vmatpush1.msra.mxu0 %v557
      %759 = vmatprep.subr.mxu0 %v560
      %760 = vmatpush1.msra.mxu0 %v559
      %761 = vmatprep.subr.mxu0 %v562
      %762 = vmatpush1.msra.mxu0 %v561
      %763 = vmatprep.subr.mxu0 %v564
      %764 = vmatpush1.msra.mxu0 %v563
      %765 = vmatprep.subr.mxu0 %v566
      %766 = vmatpush1.msra.mxu0 %v565
      %767 = vmatprep.subr.mxu0 %v568
      %768 = vmatpush1.msra.mxu0 %v567
      %769 = vmatprep.subr.mxu0 %v570
      %770 = vmatpush1.msra.mxu0 %v569
      %771 = vmatprep.subr.mxu0 %v572
      %772 = vmatpush1.msra.mxu0 %v571
      %773 = vmatprep.subr.mxu0 %v574
      %774 = vmatpush1.msra.mxu0 %v573
      %775 = vmatprep.subr.mxu0 %v576
      %776 = vmatpush1.msra.mxu0 %v575
      %777 = vmatprep.subr.mxu0 %v578
      %778 = vmatpush1.msra.mxu0 %v577
      %779 = vmatprep.subr.mxu0 %v580
      %780 = vmatpush1.msra.mxu0 %v579
      %781 = vmatprep.subr.mxu0 %v582
      %782 = vmatpush1.msra.mxu0 %v581
      %783 = vmatprep.subr.mxu0 %v584
      %784 = vmatpush1.msra.mxu0 %v583
      %785 = vmatprep.subr.mxu0 %v586
      %786 = vmatpush1.msra.mxu0 %v585
      %787 = vmatprep.subr.mxu0 %v588
      %788 = vmatpush1.msra.mxu0 %v587
      %789 = vmatprep.subr.mxu0 %v590
      %790 = vmatpush1.msra.mxu0 %v589
      %791 = vmatprep.subr.mxu0 %v592
      %792 = vmatpush1.msra.mxu0 %v591
      %793 = vmatprep.subr.mxu0 %v594
      %794 = vmatpush1.msra.mxu0 %v593
      %795 = vmatprep.subr.mxu0 %v596
      %796 = vmatpush1.msra.mxu0 %v595
      %797 = vmatprep.subr.mxu0 %v598
      %798 = vmatpush1.msra.mxu0 %v597
      %799 = vmatprep.subr.mxu0 %v600
      %800 = vmatpush1.msra.mxu0 %v599
      %801 = vmatprep.subr.mxu0 %v602
      %802 = vmatpush1.msra.mxu0 %v601
      %803 = vmatprep.subr.mxu0 %v604
      %804 = vmatpush1.msra.mxu0 %v603
      %805 = vmatprep.subr.mxu0 %v606
      %806 = vmatpush1.msra.mxu0 %v605
      %807 = vmatprep.subr.mxu0 %v608
      %808 = vmatpush1.msra.mxu0 %v607
      %809 = vmatprep.subr.mxu0 %v610
      %810 = vmatpush1.msra.mxu0 %v609
      %811 = vmatprep.subr.mxu0 %v612
      %812 = vmatpush1.msra.mxu0 %v611
      %813 = vmatprep.mubr.f32.mxu0 %v543
      %814 = vmatmul.mubr.f32.gmra.mrb[0].mxu0 %v542
      %v815 = vpop.f32.mrb[0].mxu0
      %v816 = vadd.f32 0.0, %v815
      %v817 = vpop.f32.mrb[0].mxu0
      %v818 = vadd.f32 0.0, %v817
      %819 = vdwg.mxu0
      %820 = vmatprep.subr.mxu0 %v614
      %821 = vmatpush1.msra.mxu0 %v613
      %822 = vmatprep.subr.mxu0 %v616
      %823 = vmatpush1.msra.mxu0 %v615
      %824 = vmatprep.subr.mxu0 %v618
      %825 = vmatpush1.msra.mxu0 %v617
      %826 = vmatprep.subr.mxu0 %v620
      %827 = vmatpush1.msra.mxu0 %v619
      %828 = vmatprep.subr.mxu0 %v622
      %829 = vmatpush1.msra.mxu0 %v621
      %830 = vmatprep.subr.mxu0 %v624
      %831 = vmatpush1.msra.mxu0 %v623
      %832 = vmatprep.subr.mxu0 %v626
      %833 = vmatpush1.msra.mxu0 %v625
      %834 = vmatprep.subr.mxu0 %v628
      %835 = vmatpush1.msra.mxu0 %v627
      %836 = vmatprep.subr.mxu0 %v630
      %837 = vmatpush1.msra.mxu0 %v629
      %838 = vmatprep.subr.mxu0 %v632
      %839 = vmatpush1.msra.mxu0 %v631
      %840 = vmatprep.subr.mxu0 %v634
      %841 = vmatpush1.msra.mxu0 %v633
      %842 = vmatprep.subr.mxu0 %v636
      %843 = vmatpush1.msra.mxu0 %v635
      %844 = vmatprep.subr.mxu0 %v638
      %845 = vmatpush1.msra.mxu0 %v637
      %846 = vmatprep.subr.mxu0 %v640
      %847 = vmatpush1.msra.mxu0 %v639
      %848 = vmatprep.subr.mxu0 %v642
      %849 = vmatpush1.msra.mxu0 %v641
      %850 = vmatprep.subr.mxu0 %v644
      %851 = vmatpush1.msra.mxu0 %v643
      %852 = vmatprep.subr.mxu0 %v646
      %853 = vmatpush1.msra.mxu0 %v645
      %854 = vmatprep.subr.mxu0 %v648
      %855 = vmatpush1.msra.mxu0 %v647
      %856 = vmatprep.subr.mxu0 %v650
      %857 = vmatpush1.msra.mxu0 %v649
      %858 = vmatprep.subr.mxu0 %v652
      %859 = vmatpush1.msra.mxu0 %v651
      %860 = vmatprep.subr.mxu0 %v654
      %861 = vmatpush1.msra.mxu0 %v653
      %862 = vmatprep.subr.mxu0 %v656
      %863 = vmatpush1.msra.mxu0 %v655
      %864 = vmatprep.subr.mxu0 %v658
      %865 = vmatpush1.msra.mxu0 %v657
      %866 = vmatprep.subr.mxu0 %v660
      %867 = vmatpush1.msra.mxu0 %v659
      %868 = vmatprep.subr.mxu0 %v662
      %869 = vmatpush1.msra.mxu0 %v661
      %870 = vmatprep.subr.mxu0 %v664
      %871 = vmatpush1.msra.mxu0 %v663
      %872 = vmatprep.subr.mxu0 %v666
      %873 = vmatpush1.msra.mxu0 %v665
      %874 = vmatprep.subr.mxu0 %v668
      %875 = vmatpush1.msra.mxu0 %v667
      %876 = vmatprep.subr.mxu0 %v670
      %877 = vmatpush1.msra.mxu0 %v669
      %878 = vmatprep.subr.mxu0 %v672
      %879 = vmatpush1.msra.mxu0 %v671
      %880 = vmatprep.subr.mxu0 %v674
      %881 = vmatpush1.msra.mxu0 %v673
      %882 = vmatprep.subr.mxu0 %v676
      %883 = vmatpush1.msra.mxu0 %v675
      %884 = vmatprep.mubr.f32.mxu0 %v545
      %885 = vmatmul.mubr.f32.gmra.mrb[0].mxu0 %v544
      %v886 = vpop.f32.mrb[0].mxu0
      %v887 = vadd.f32 %v816, %v886
      %v888 = vpop.f32.mrb[0].mxu0
      %v889 = vadd.f32 %v818, %v888
      %890 = vdwg.mxu0
      %891 = vmatprep.subr.mxu0 %v678
      %892 = vmatpush1.msra.mxu0 %v677
      %893 = vmatprep.subr.mxu0 %v680
      %894 = vmatpush1.msra.mxu0 %v679
      %895 = vmatprep.subr.mxu0 %v682
      %896 = vmatpush1.msra.mxu0 %v681
      %897 = vmatprep.subr.mxu0 %v684
      %898 = vmatpush1.msra.mxu0 %v683
      %899 = vmatprep.subr.mxu0 %v686
      %900 = vmatpush1.msra.mxu0 %v685
      %901 = vmatprep.subr.mxu0 %v688
      %902 = vmatpush1.msra.mxu0 %v687
      %903 = vmatprep.subr.mxu0 %v690
      %904 = vmatpush1.msra.mxu0 %v689
      %905 = vmatprep.subr.mxu0 %v692
      %906 = vmatpush1.msra.mxu0 %v691
      %907 = vmatprep.subr.mxu0 %v694
      %908 = vmatpush1.msra.mxu0 %v693
      %909 = vmatprep.subr.mxu0 %v696
      %910 = vmatpush1.msra.mxu0 %v695
      %911 = vmatprep.subr.mxu0 %v698
      %912 = vmatpush1.msra.mxu0 %v697
      %913 = vmatprep.subr.mxu0 %v700
      %914 = vmatpush1.msra.mxu0 %v699
      %915 = vmatprep.subr.mxu0 %v702
      %916 = vmatpush1.msra.mxu0 %v701
      %917 = vmatprep.subr.mxu0 %v704
      %918 = vmatpush1.msra.mxu0 %v703
      %919 = vmatprep.subr.mxu0 %v706
      %920 = vmatpush1.msra.mxu0 %v705
      %921 = vmatprep.subr.mxu0 %v708
      %922 = vmatpush1.msra.mxu0 %v707
      %923 = vmatprep.subr.mxu0 %v710
      %924 = vmatpush1.msra.mxu0 %v709
      %925 = vmatprep.subr.mxu0 %v712
      %926 = vmatpush1.msra.mxu0 %v711
      %927 = vmatprep.subr.mxu0 %v714
      %928 = vmatpush1.msra.mxu0 %v713
      %929 = vmatprep.subr.mxu0 %v716
      %930 = vmatpush1.msra.mxu0 %v715
      %931 = vmatprep.subr.mxu0 %v718
      %932 = vmatpush1.msra.mxu0 %v717
      %933 = vmatprep.subr.mxu0 %v720
      %934 = vmatpush1.msra.mxu0 %v719
      %935 = vmatprep.subr.mxu0 %v722
      %936 = vmatpush1.msra.mxu0 %v721
      %937 = vmatprep.subr.mxu0 %v724
      %938 = vmatpush1.msra.mxu0 %v723
      %939 = vmatprep.subr.mxu0 %v726
      %940 = vmatpush1.msra.mxu0 %v725
      %941 = vmatprep.subr.mxu0 %v728
      %942 = vmatpush1.msra.mxu0 %v727
      %943 = vmatprep.subr.mxu0 %v730
      %944 = vmatpush1.msra.mxu0 %v729
      %945 = vmatprep.subr.mxu0 %v732
      %946 = vmatpush1.msra.mxu0 %v731
      %947 = vmatprep.subr.mxu0 %v734
      %948 = vmatpush1.msra.mxu0 %v733
      %949 = vmatprep.subr.mxu0 %v736
      %950 = vmatpush1.msra.mxu0 %v735
      %951 = vmatprep.subr.mxu0 %v738
      %952 = vmatpush1.msra.mxu0 %v737
      %953 = vmatprep.subr.mxu0 %v740
      %954 = vmatpush1.msra.mxu0 %v739
      %955 = vmatprep.mubr.f32.mxu0 %v547
      %956 = vmatmul.mubr.f32.gmra.mrb[0].mxu0 %v546
      %v957 = vpop.f32.mrb[0].mxu0
      %v958 = vadd.f32 %v887, %v957
      %v959 = vpop.f32.mrb[0].mxu0
      %v960 = vadd.f32 %v889, %v959
      %961 = vdwg.mxu0
      %962 = vmatprep.subr.mxu0 %v742
      %963 = vmatpush1.msra.mxu0 %v741
      %964 = vmatprep.subr.mxu0 %v744
      %965 = vmatpush1.msra.mxu0 %v743
      %966 = vmatprep.subr.mxu0 0.0
      %967 = vmatpush1.msra.mxu0 0.0
      %968 = vmatprep.subr.mxu0 0.0
      %969 = vmatpush1.msra.mxu0 0.0
      %970 = vmatprep.subr.mxu0 0.0
      %971 = vmatpush1.msra.mxu0 0.0
      %972 = vmatprep.subr.mxu0 0.0
      %973 = vmatpush1.msra.mxu0 0.0
      %974 = vmatprep.subr.mxu0 0.0
      %975 = vmatpush1.msra.mxu0 0.0
      %976 = vmatprep.subr.mxu0 0.0
      %977 = vmatpush1.msra.mxu0 0.0
      %978 = vmatprep.subr.mxu0 0.0
      %979 = vmatpush1.msra.mxu0 0.0
      %980 = vmatprep.subr.mxu0 0.0
      %981 = vmatpush1.msra.mxu0 0.0
      %982 = vmatprep.subr.mxu0 0.0
      %983 = vmatpush1.msra.mxu0 0.0
      %984 = vmatprep.subr.mxu0 0.0
      %985 = vmatpush1.msra.mxu0 0.0
      %986 = vmatprep.subr.mxu0 0.0
      %987 = vmatpush1.msra.mxu0 0.0
      %988 = vmatprep.subr.mxu0 0.0
      %989 = vmatpush1.msra.mxu0 0.0
      %990 = vmatprep.subr.mxu0 0.0
      %991 = vmatpush1.msra.mxu0 0.0
      %992 = vmatprep.subr.mxu0 0.0
      %993 = vmatpush1.msra.mxu0 0.0
      %994 = vmatprep.subr.mxu0 0.0
      %995 = vmatpush1.msra.mxu0 0.0
      %996 = vmatprep.subr.mxu0 0.0
      %997 = vmatpush1.msra.mxu0 0.0
      %998 = vmatprep.subr.mxu0 0.0
      %999 = vmatpush1.msra.mxu0 0.0
      %1000 = vmatprep.subr.mxu0 0.0
      %1001 = vmatpush1.msra.mxu0 0.0
      %1002 = vmatprep.subr.mxu0 0.0
      %1003 = vmatpush1.msra.mxu0 0.0
      %1004 = vmatprep.subr.mxu0 0.0
      %1005 = vmatpush1.msra.mxu0 0.0
      %1006 = vmatprep.subr.mxu0 0.0
      %1007 = vmatpush1.msra.mxu0 0.0
      %1008 = vmatprep.subr.mxu0 0.0
      %1009 = vmatpush1.msra.mxu0 0.0
      %1010 = vmatprep.subr.mxu0 0.0
      %1011 = vmatpush1.msra.mxu0 0.0
      %1012 = vmatprep.subr.mxu0 0.0
      %1013 = vmatpush1.msra.mxu0 0.0
      %1014 = vmatprep.subr.mxu0 0.0
      %1015 = vmatpush1.msra.mxu0 0.0
      %1016 = vmatprep.subr.mxu0 0.0
      %1017 = vmatpush1.msra.mxu0 0.0
      %1018 = vmatprep.subr.mxu0 0.0
      %1019 = vmatpush1.msra.mxu0 0.0
      %1020 = vmatprep.subr.mxu0 0.0
      %1021 = vmatpush1.msra.mxu0 0.0
      %1022 = vmatprep.subr.mxu0 0.0
      %1023 = vmatpush1.msra.mxu0 0.0
      %1024 = vmatprep.subr.mxu0 0.0
      %1025 = vmatpush1.msra.mxu0 0.0
      %1026 = vmatprep.mubr.f32.mxu0 0.0
      %1027 = vmatmul.mubr.f32.gmra.mrb[0].mxu0 %v747
      %v1028 = vpop.f32.mrb[0].mxu0
      %v1029 = vadd.f32 %v958, %v1028
      %v1030 = vpop.f32.mrb[0].mxu0
      %v1031 = vadd.f32 %v960, %v1030
      %1032 = vdwg.mxu0
      %v1033 = vtanh.pop %v1029
      %v1034 = vtanh.pop %v1031
      %1035 = vst [vmem:[%s197] sm:$0x3f] %v1033
      %vm1036 = vcmask 553984
      %1037 = vst.msk [vmem:[%s197 + $0x8] sm:$0x3f] %vm1036, %v1034
      %p1038 = scmp.lt.s32.totalorder %s15, 1
      %s1039 = scalar_select %p1038, %s15, 1
      %s1040 = smul.addr %s1039, 2
      %s1041 = smul.addr %s1040, 8
      %s1042 = scalar_lea.vmem %s4, %s1041
      // Predicated region
      $region37: #{lenet5_forward.3} parent=35 // pred_check
        %p1043 = pneg %p122
      $region38: #{lenet5_forward.3} parent=35 // pred_check_branch
        %1045 = sbr.rel (%p1043) target = $region40
      $region39: #{lenet5_forward.3} parent=35 // pred_region
        _
      $region40: #{lenet5_forward.3} parent=35 // pred_fallthru
        _
    $region36: #{lenet5_forward.3} parent=5 // pred_fallthru
      _
    %p1046 = scmp.le.s32.totalorder 2, %s10
    // Predicated region
    $region41: #{lenet5_forward.3} parent=5 // pred_check
      %p1047 = pneg %p1046
    $region42: #{lenet5_forward.3} parent=5 // pred_check_branch
      %1049 = sbr.rel (%p1047) target = $region44
    $region43: #{lenet5_forward.3} parent=5 // pred_region
      %s1050 = ssub.s32 %s10, 2
      // Predicated region
      $region45: #{lenet5_forward.3} parent=43 // pred_check
        %p1051 = pneg %p128
      $region46: #{lenet5_forward.3} parent=43 // pred_check_branch
        %1053 = sbr.rel (%p1051) target = $region48
      $region47: #{lenet5_forward.3} parent=43 // pred_region
        %p1054 = scmp.lt.s32.totalorder %s16, 1
        %s1055 = scalar_select %p1054, %s16, 1
        %s1056 = smul.addr %s1055, 2
        %s1057 = smul.addr %s1056, 8
        %s1058 = scalar_lea.vmem %s4, %s1057
      $region48: #{lenet5_forward.3} parent=43 // pred_fallthru
        _
    $region44: #{lenet5_forward.3} parent=5 // pred_fallthru
      _
  $region6: #{lenet5_forward.3} parent=0 // loop_footer
    %s14 = sadd.s32 1, %s10
  $region7: #{lenet5_forward.3} parent=0 // loop_footer_branch
    %9 = sbr.rel target = $region3
  $region8: #{lenet5_forward.3} parent=0 // loop_exit
    _

// kernel: lenet5_forward.4
$region0: #{lenet5_forward.4}
  #allocation0 [shape = 'u32[]', space=smem, size = 0x4, offset = 0x4, fixed_abs, tag = 'smem constant byte address 0x4 - core index']
  #allocation1 [shape = 'u32[144,128]{1,0:T(1,128)}', space=vmem, size = 0x12000, scoped, tag = 'internal scratch']
  %s0 = inlined_call_operand.vmem [shape: f32[2,150,100], index: 0, kind: input, shape index: {}]
  %s1 = inlined_call_operand.vmem [shape: f32[16,150], index: 1, kind: input, shape index: {}]
  %s2 = inlined_call_operand.vmem [shape: f32[16,1], index: 2, kind: input, shape index: {}]
  %s3 = inlined_call_operand.vmem [shape: f32[100,25], index: 3, kind: input, shape index: {}]
  %s4 = inlined_call_operand.vmem [shape: f32[2,16,25], index: 4, kind: output, shape index: {}]
  %s5 = sld [smem:[#allocation0]]
  $region49: #{lenet5_forward.4} parent=0
    _
  %s7 = ssub.s32 1, %s5
  %s8 = scalar_select 0, %s7, %s5
  loop: start=0, step=1, limit=4
  $region2: #{lenet5_forward.4} parent=0 // loop_pre_header
    _
  $region3: #{lenet5_forward.4} parent=0 // loop_header
    %s10 = sphi 0, %s14
    %p11 = scmp.ge.s32.totalorder %s10, 4
    %s20 = sphi 0, %s22
    %s23 = sphi 0, %s20
    %s24 = sphi 0, %s23
    %s40 = sphi 0, %s24
    %s44 = sphi 0, %s44
    %s46 = sphi 0, %s44
    %s47 = sphi 0, %s46
    %s61 = sphi 0, %s47
    %s65 = sphi 0, %s65
    %s67 = sphi 0, %s65
    %s68 = sphi 0, %s67
    %s82 = sphi 0, %s68
    %s86 = sphi 0, %s86
    %s88 = sphi 0, %s86
    %s89 = sphi 0, %s88
    %s103 = sphi 0, %s89
    %s109 = sphi 0, %s111
    %s112 = sphi 0, %s109
    %s113 = sphi 0, %s112
    %s129 = sphi 0, %s113
  $region4: #{lenet5_forward.4} parent=0 // loop_header_branch
    %13 = sbr.rel (%p11) target = $region8
  $region5: #{lenet5_forward.4} parent=0 // loop_body
    %s15 = ssub.s32 %s10, 1
    %s16 = ssub.s32 %s10, 2
    %s17 = sadd.s32 %s10, 1
    %s18 = ssub.s32 %s10, %s17
    %p19 = scmp.eq.s32.totalorder %s18, 0
    %s21 = sadd.s32 %s20, 1
    %s22 = scalar_select %p19, %s20, %s21
    %p25 = pneg %p19
    %p26 = scmp.eq.s32.totalorder %s10, 1
    %p27 = por %p25, %p26
    %p28 = scmp.ne.s32.totalorder %s20, %s23
    %p29 = scmp.eq.s32.totalorder %s10, 0
    %p30 = por %p28, %p29
    %p31 = scmp.ne.s32.totalorder %s20, %s23
    %p32 = scmp.eq.s32.totalorder %s15, 1
    %p33 = por %p31, %p32
    %p34 = scmp.ne.s32.totalorder %s23, %s24
    %p35 = scmp.eq.s32.totalorder %s15, 0
    %p36 = por %p34, %p35
    %p37 = scmp.ne.s32.totalorder %s23, %s24
    %p38 = scmp.eq.s32.totalorder %s16, 1
    %p39 = por %p37, %p38
    %p41 = scmp.ne.s32.totalorder %s24, %s40
    %p42 = scmp.eq.s32.totalorder %s16, 0
    %p43 = por %p41, %p42
    %s45 = sadd.s32 %s44, 1
    %p48 = scmp.eq.s32.totalorder %s10, 1
    %p49 = scmp.ne.s32.totalorder %s44, %s46
    %p50 = scmp.eq.s32.totalorder %s10, 0
    %p51 = por %p49, %p50
    %p52 = scmp.ne.s32.totalorder %s44, %s46
    %p53 = scmp.eq.s32.totalorder %s15, 1
    %p54 = por %p52, %p53
    %p55 = scmp.ne.s32.totalorder %s46, %s47
    %p56 = scmp.eq.s32.totalorder %s15, 0
    %p57 = por %p55, %p56
    %p58 = scmp.ne.s32.totalorder %s46, %s47
    %p59 = scmp.eq.s32.totalorder %s16, 1
    %p60 = por %p58, %p59
    %p62 = scmp.ne.s32.totalorder %s47, %s61
    %p63 = scmp.eq.s32.totalorder %s16, 0
    %p64 = por %p62, %p63
    %s66 = sadd.s32 %s65, 1
    %p69 = scmp.eq.s32.totalorder %s10, 1
    %p70 = scmp.ne.s32.totalorder %s65, %s67
    %p71 = scmp.eq.s32.totalorder %s10, 0
    %p72 = por %p70, %p71
    %p73 = scmp.ne.s32.totalorder %s65, %s67
    %p74 = scmp.eq.s32.totalorder %s15, 1
    %p75 = por %p73, %p74
    %p76 = scmp.ne.s32.totalorder %s67, %s68
    %p77 = scmp.eq.s32.totalorder %s15, 0
    %p78 = por %p76, %p77
    %p79 = scmp.ne.s32.totalorder %s67, %s68
    %p80 = scmp.eq.s32.totalorder %s16, 1
    %p81 = por %p79, %p80
    %p83 = scmp.ne.s32.totalorder %s68, %s82
    %p84 = scmp.eq.s32.totalorder %s16, 0
    %p85 = por %p83, %p84
    %s87 = sadd.s32 %s86, 1
    %p90 = scmp.eq.s32.totalorder %s10, 1
    %p91 = scmp.ne.s32.totalorder %s86, %s88
    %p92 = scmp.eq.s32.totalorder %s10, 0
    %p93 = por %p91, %p92
    %p94 = scmp.ne.s32.totalorder %s86, %s88
    %p95 = scmp.eq.s32.totalorder %s15, 1
    %p96 = por %p94, %p95
    %p97 = scmp.ne.s32.totalorder %s88, %s89
    %p98 = scmp.eq.s32.totalorder %s15, 0
    %p99 = por %p97, %p98
    %p100 = scmp.ne.s32.totalorder %s88, %s89
    %p101 = scmp.eq.s32.totalorder %s16, 1
    %p102 = por %p100, %p101
    %p104 = scmp.ne.s32.totalorder %s89, %s103
    %p105 = scmp.eq.s32.totalorder %s16, 0
    %p106 = por %p104, %p105
    %s107 = ssub.s32 %s10, %s17
    %p108 = scmp.eq.s32.totalorder %s107, 0
    %s110 = sadd.s32 %s109, 1
    %s111 = scalar_select %p108, %s109, %s110
    %p114 = pneg %p108
    %p115 = scmp.eq.s32.totalorder %s10, 1
    %p116 = por %p114, %p115
    %p117 = scmp.ne.s32.totalorder %s109, %s112
    %p118 = scmp.eq.s32.totalorder %s10, 0
    %p119 = por %p117, %p118
    %p120 = scmp.ne.s32.totalorder %s109, %s112
    %p121 = scmp.eq.s32.totalorder %s15, 1
    %p122 = por %p120, %p121
    %p123 = scmp.ne.s32.totalorder %s112, %s113
    %p124 = scmp.eq.s32.totalorder %s15, 0
    %p125 = por %p123, %p124
    %p126 = scmp.ne.s32.totalorder %s112, %s113
    %p127 = scmp.eq.s32.totalorder %s16, 1
    %p128 = por %p126, %p127
    %p130 = scmp.ne.s32.totalorder %s113, %s129
    %p131 = scmp.eq.s32.totalorder %s16, 0
    %p132 = por %p130, %p131
    %p133 = scmp.le.s32.totalorder 1, %s10
    %p134 = scmp.lt.s32.totalorder %s10, 3
    %p135 = pnand %p133, %p134
    %p136 = pneg %p135
    // Predicated region
    $region9: #{lenet5_forward.4} parent=5 // pred_check
      _
    $region10: #{lenet5_forward.4} parent=5 // pred_check_branch
      %138 = sbr.rel (%p135) target = $region12
    $region11: #{lenet5_forward.4} parent=5 // pred_region
      %s139 = ssub.s32 %s10, 1
      // Predicated region
      $region13: #{lenet5_forward.4} parent=11 // pred_check
        %p140 = pneg %p57
      $region14: #{lenet5_forward.4} parent=11 // pred_check_branch
        %142 = sbr.rel (%p140) target = $region16
      $region15: #{lenet5_forward.4} parent=11 // pred_region
        _
      $region16: #{lenet5_forward.4} parent=11 // pred_fallthru
        _
      // Predicated region
      $region17: #{lenet5_forward.4} parent=11 // pred_check
        %p143 = pneg %p78
      $region18: #{lenet5_forward.4} parent=11 // pred_check_branch
        %145 = sbr.rel (%p143) target = $region20
      $region19: #{lenet5_forward.4} parent=11 // pred_region
        _
      $region20: #{lenet5_forward.4} parent=11 // pred_fallthru
        _
      // Predicated region
      $region21: #{lenet5_forward.4} parent=11 // pred_check
        %p146 = pneg %p99
      $region22: #{lenet5_forward.4} parent=11 // pred_check_branch
        %148 = sbr.rel (%p146) target = $region24
      $region23: #{lenet5_forward.4} parent=11 // pred_region
        _
      $region24: #{lenet5_forward.4} parent=11 // pred_fallthru
        _
    $region12: #{lenet5_forward.4} parent=5 // pred_fallthru
      _
    %p149 = scmp.lt.s32.totalorder %s10, 2
    // Predicated region
    $region25: #{lenet5_forward.4} parent=5 // pred_check
      %p150 = pneg %p149
    $region26: #{lenet5_forward.4} parent=5 // pred_check_branch
      %152 = sbr.rel (%p150) target = $region28
    $region27: #{lenet5_forward.4} parent=5 // pred_region
      // Predicated region
      $region29: #{lenet5_forward.4} parent=27 // pred_check
        %p153 = pneg %p30
      $region30: #{lenet5_forward.4} parent=27 // pred_check_branch
        %155 = sbr.rel (%p153) target = $region32
      $region31: #{lenet5_forward.4} parent=27 // pred_region
        %p156 = scmp.lt.s32.totalorder %s10, 1
        %s157 = scalar_select %p156, %s10, 1
        %s158 = smul.addr %s157, 19
        %s159 = smul.addr %s158, 8
        %s160 = scalar_lea.vmem %s0, %s159
      $region32: #{lenet5_forward.4} parent=27 // pred_fallthru
        _
    $region28: #{lenet5_forward.4} parent=5 // pred_fallthru
      _
    %p161 = scmp.le.s32.totalorder 1, %s10
    %p162 = scmp.lt.s32.totalorder %s10, 3
    %p163 = pnand %p161, %p162
    %p164 = pneg %p163
    // Predicated region
    $region33: #{lenet5_forward.4} parent=5 // pred_check
      _
    $region34: #{lenet5_forward.4} parent=5 // pred_check_branch
      %166 = sbr.rel (%p163) target = $region36
    $region35: #{lenet5_forward.4} parent=5 // pred_region
      %s167 = ssub.s32 %s10, 1
      %p168 = scmp.lt.s32.totalorder %s15, 1
      %s169 = scalar_select %p168, %s15, 1
      %s170 = smul.addr %s169, 19
      %s171 = smul.addr %s170, 8
      %s172 = scalar_lea.vmem %s0, %s171
      %p173 = pneg %p36
      %p174 = pneg %p33
      %p175 = pneg %p57
      %p176 = pneg %p54
      %p177 = pneg %p78
      %p178 = pneg %p75
      %p179 = pneg %p99
      %p180 = pneg %p96
      %p181 = pneg %p125
      %p182 = pneg %p122
      %p183 = scmp.lt.s32.totalorder %s15, 1
      %s184 = scalar_select %p183, %s15, 1
      %s185 = smul.addr %s184, 2
      %s186 = smul.addr %s185, 8
      %s187 = scalar_lea.vmem %s4, %s186
      %p188 = scmp.lt.s32.totalorder %s15, 1
      %s189 = scalar_select %p188, %s15, 1
      %s190 = smul.addr %s189, 19
      %s191 = smul.addr %s190, 8
      %s192 = scalar_lea.vmem %s0, %s191
      %p193 = scmp.lt.s32.totalorder %s15, 1
      %s194 = scalar_select %p193, %s15, 1
      %s195 = smul.addr %s194, 2
      %s196 = smul.addr %s195, 8
      %s197 = scalar_lea.vmem %s4, %s196
      %v198 = vld [vmem:[%s1] sm:$0xff]
      %v199 = vld [vmem:[%s1 + $0x8] sm:$0xff]
      %v200 = vld [vmem:[%s1 + $0x10] sm:$0xff]
      %v201 = vld [vmem:[%s1 + $0x18] sm:$0xff]
      %v202 = vld [vmem:[%s192] sm:$0xff]
      %v203 = vld [vmem:[%s192 + $0x8] sm:$0xff]
      %v204 = vld [vmem:[%s192 + $0x10] sm:$0xff]
      %v205 = vld [vmem:[%s192 + $0x18] sm:$0xff]
      %v206 = vld [vmem:[%s192 + $0x20] sm:$0xff]
      %v207 = vld [vmem:[%s192 + $0x28] sm:$0xff]
      %v208 = vld [vmem:[%s192 + $0x30] sm:$0xff]
      %v209 = vld [vmem:[%s192 + $0x38] sm:$0xff]
      %v210 = vld [vmem:[%s192 + $0x40] sm:$0xff]
      %v211 = vld [vmem:[%s192 + $0x48] sm:$0xff]
      %v212 = vld [vmem:[%s192 + $0x50] sm:$0xff]
      %v213 = vld [vmem:[%s192 + $0x58] sm:$0xff]
      %v214 = vld [vmem:[%s192 + $0x60] sm:$0xff]
      %v215 = vld [vmem:[%s192 + $0x68] sm:$0xff]
      %v216 = vld [vmem:[%s192 + $0x70] sm:$0xff]
      %v217 = vld [vmem:[%s192 + $0x78] sm:$0xff]
      %v218 = vld [vmem:[%s192 + $0x80] sm:$0xff]
      %v219 = vld [vmem:[%s192 + $0x88] sm:$0xff]
      %v220 = vld [vmem:[%s192 + $0x90] sm:$0x3f]
      %v221 = vld [vmem:[%s2] sm:$0xff]
      %v222 = vld [vmem:[%s2 + $0x8] sm:$0xff]
      %224 = vset.pattern.permute.xlu0 0
      %225 = vperm.xlu0 %224, %v221
      %v226 = vpop.permute.xlu0 %225
      %229 = vset.pattern.permute.xlu0 0
      %230 = vperm.xlu0 %229, %v222
      %v231 = vpop.permute.xlu0 %230
      %vm233 = vcmask 179200
      %v235 = vsel %vm233, %v199, 0
      %v238 = vsel %vm233, %v201, 0
      %vm240 = vcmask 1045504
      %v242 = vsel %vm240, %v220, 0
      %244 = vmatprep.subr.mxu0 0.0
      %245 = vmatpush1.msra.mxu0 %v202
      %246 = vmatprep.subr.mxu0 0.0
      %247 = vmatpush1.msra.mxu0 %v203
      %248 = vmatprep.subr.mxu0 0.0
      %249 = vmatpush1.msra.mxu0 %v204
      %250 = vmatprep.subr.mxu0 0.0
      %251 = vmatpush1.msra.mxu0 %v205
      %252 = vmatprep.subr.mxu0 0.0
      %253 = vmatpush1.msra.mxu0 %v206
      %254 = vmatprep.subr.mxu0 0.0
      %255 = vmatpush1.msra.mxu0 %v207
      %256 = vmatprep.subr.mxu0 0.0
      %257 = vmatpush1.msra.mxu0 %v208
      %258 = vmatprep.subr.mxu0 0.0
      %259 = vmatpush1.msra.mxu0 %v209
      %260 = vmatprep.subr.mxu0 0.0
      %261 = vmatpush1.msra.mxu0 %v210
      %262 = vmatprep.subr.mxu0 0.0
      %263 = vmatpush1.msra.mxu0 %v211
      %264 = vmatprep.subr.mxu0 0.0
      %265 = vmatpush1.msra.mxu0 %v212
      %266 = vmatprep.subr.mxu0 0.0
      %267 = vmatpush1.msra.mxu0 %v213
      %268 = vmatprep.subr.mxu0 0.0
      %269 = vmatpush1.msra.mxu0 %v214
      %270 = vmatprep.subr.mxu0 0.0
      %271 = vmatpush1.msra.mxu0 %v215
      %272 = vmatprep.subr.mxu0 0.0
      %273 = vmatpush1.msra.mxu0 %v216
      %274 = vmatprep.subr.mxu0 0.0
      %275 = vmatpush1.msra.mxu0 %v217
      %276 = vmatprep.subr.mxu0 0.0
      %277 = vmatpush1.msra.mxu0 %v218
      %278 = vmatprep.subr.mxu0 0.0
      %279 = vmatpush1.msra.mxu0 %v219
      %280 = vmatprep.subr.mxu0 0.0
      %281 = vmatpush1.msra.mxu0 %v242
      %282 = vmatprep.subr.mxu0 0.0
      %283 = vmatpush1.msra.mxu0 0.0
      %284 = vmatprep.subr.mxu0 0.0
      %285 = vmatpush1.msra.mxu0 0.0
      %286 = vmatprep.subr.mxu0 0.0
      %287 = vmatpush1.msra.mxu0 0.0
      %288 = vmatprep.subr.mxu0 0.0
      %289 = vmatpush1.msra.mxu0 0.0
      %290 = vmatprep.subr.mxu0 0.0
      %291 = vmatpush1.msra.mxu0 0.0
      %292 = vmatprep.subr.mxu0 0.0
      %293 = vmatpush1.msra.mxu0 0.0
      %294 = vmatprep.subr.mxu0 0.0
      %295 = vmatpush1.msra.mxu0 0.0
      %296 = vmatprep.subr.mxu0 0.0
      %297 = vmatpush1.msra.mxu0 0.0
      %298 = vmatprep.subr.mxu0 0.0
      %299 = vmatpush1.msra.mxu0 0.0
      %300 = vmatprep.subr.mxu0 0.0
      %301 = vmatpush1.msra.mxu0 0.0
      %302 = vmatprep.subr.mxu0 0.0
      %303 = vmatpush1.msra.mxu0 0.0
      %304 = vmatprep.subr.mxu0 0.0
      %305 = vmatpush1.msra.mxu0 0.0
      %306 = vmatprep.subr.mxu0 0.0
      %307 = vmatpush1.msra.mxu0 0.0
      %308 = vmatprep.mubr.f32.mxu0 %v235
      %309 = vmatmul.mubr.f32.gmra.mrb[0].mxu0 %v198
      %v310 = vpop.f32.mrb[0].mxu0
      %v311 = vadd.f32 %v226, %v310
      %v312 = vpop.f32.mrb[0].mxu0
      %313 = vmatprep.mubr.f32.mxu0 %v238
      %314 = vmatmul.mubr.f32.gmra.mrb[0].mxu0 %v200
      %v315 = vpop.f32.mrb[0].mxu0
      %v316 = vadd.f32 %v231, %v315
      %v317 = vpop.f32.mrb[0].mxu0
      %318 = vdwg.mxu0
      %v319 = vtanh.pop %v311
      %v320 = vtanh.pop %v316
      %v321 = vld [vmem:[%s3] sm:$0xff]
      %v322 = vld [vmem:[%s3 + $0x8] sm:$0xff]
      %v323 = vld [vmem:[%s3 + $0x10] sm:$0xff]
      %v324 = vld [vmem:[%s3 + $0x18] sm:$0xff]
      %v325 = vld [vmem:[%s3 + $0x20] sm:$0xff]
      %v326 = vld [vmem:[%s3 + $0x28] sm:$0xff]
      %v327 = vld [vmem:[%s3 + $0x30] sm:$0xff]
      %v328 = vld [vmem:[%s3 + $0x38] sm:$0xff]
      %v329 = vld [vmem:[%s3 + $0x40] sm:$0xff]
      %v330 = vld [vmem:[%s3 + $0x48] sm:$0xff]
      %v331 = vld [vmem:[%s3 + $0x50] sm:$0xff]
      %v332 = vld [vmem:[%s3 + $0x58] sm:$0xff]
      %v333 = vld [vmem:[%s3 + $0x60] sm:$0xf]
      %vm334 = vcmask 818176
      %v336 = vsel %vm334, %v319, 0
      %v339 = vsel %vm334, %v320, 0
      %vm341 = vcmask 1043456
      %v343 = vsel %vm341, %v333, 0
      %345 = vmatprep.subr.mxu0 0.0
      %346 = vmatpush1.msra.mxu0 %v321
      %347 = vmatprep.subr.mxu0 0.0
      %348 = vmatpush1.msra.mxu0 %v322
      %349 = vmatprep.subr.mxu0 0.0
      %350 = vmatpush1.msra.mxu0 %v323
      %351 = vmatprep.subr.mxu0 0.0
      %352 = vmatpush1.msra.mxu0 %v324
      %353 = vmatprep.subr.mxu0 0.0
      %354 = vmatpush1.msra.mxu0 %v325
      %355 = vmatprep.subr.mxu0 0.0
      %356 = vmatpush1.msra.mxu0 %v326
      %357 = vmatprep.subr.mxu0 0.0
      %358 = vmatpush1.msra.mxu0 %v327
      %359 = vmatprep.subr.mxu0 0.0
      %360 = vmatpush1.msra.mxu0 %v328
      %361 = vmatprep.subr.mxu0 0.0
      %362 = vmatpush1.msra.mxu0 %v329
      %363 = vmatprep.subr.mxu0 0.0
      %364 = vmatpush1.msra.mxu0 %v330
      %365 = vmatprep.subr.mxu0 0.0
      %366 = vmatpush1.msra.mxu0 %v331
      %367 = vmatprep.subr.mxu0 0.0
      %368 = vmatpush1.msra.mxu0 %v332
      %369 = vmatprep.subr.mxu0 0.0
      %370 = vmatpush1.msra.mxu0 %v343
      %371 = vmatprep.subr.mxu0 0.0
      %372 = vmatpush1.msra.mxu0 0.0
      %373 = vmatprep.subr.mxu0 0.0
      %374 = vmatpush1.msra.mxu0 0.0
      %375 = vmatprep.subr.mxu0 0.0
      %376 = vmatpush1.msra.mxu0 0.0
      %377 = vmatprep.subr.mxu0 0.0
      %378 = vmatpush1.msra.mxu0 0.0
      %379 = vmatprep.subr.mxu0 0.0
      %380 = vmatpush1.msra.mxu0 0.0
      %381 = vmatprep.subr.mxu0 0.0
      %382 = vmatpush1.msra.mxu0 0.0
      %383 = vmatprep.subr.mxu0 0.0
      %384 = vmatpush1.msra.mxu0 0.0
      %385 = vmatprep.subr.mxu0 0.0
      %386 = vmatpush1.msra.mxu0 0.0
      %387 = vmatprep.subr.mxu0 0.0
      %388 = vmatpush1.msra.mxu0 0.0
      %389 = vmatprep.subr.mxu0 0.0
      %390 = vmatpush1.msra.mxu0 0.0
      %391 = vmatprep.subr.mxu0 0.0
      %392 = vmatpush1.msra.mxu0 0.0
      %393 = vmatprep.subr.mxu0 0.0
      %394 = vmatpush1.msra.mxu0 0.0
      %395 = vmatprep.subr.mxu0 0.0
      %396 = vmatpush1.msra.mxu0 0.0
      %397 = vmatprep.subr.mxu0 0.0
      %398 = vmatpush1.msra.mxu0 0.0
      %399 = vmatprep.subr.mxu0 0.0
      %400 = vmatpush1.msra.mxu0 0.0
      %401 = vmatprep.subr.mxu0 0.0
      %402 = vmatpush1.msra.mxu0 0.0
      %403 = vmatprep.subr.mxu0 0.0
      %404 = vmatpush1.msra.mxu0 0.0
      %405 = vmatprep.subr.mxu0 0.0
      %406 = vmatpush1.msra.mxu0 0.0
      %407 = vmatprep.subr.mxu0 0.0
      %408 = vmatpush1.msra.mxu0 0.0
      %409 = vmatprep.mubr.f32.mxu0 0.0
      %410 = vmatmul.mubr.f32.gmra.mrb[0].mxu0 %v336
      %v411 = vpop.f32.mrb[0].mxu0
      %v412 = vadd.f32 0.0, %v411
      %v413 = vpop.f32.mrb[0].mxu0
      %414 = vmatprep.mubr.f32.mxu0 0.0
      %415 = vmatmul.mubr.f32.gmra.mrb[0].mxu0 %v339
      %v416 = vpop.f32.mrb[0].mxu0
      %v417 = vadd.f32 0.0, %v416
      %v418 = vpop.f32.mrb[0].mxu0
      %419 = vdwg.mxu0
      %v420 = vtanh.pop %v412
      %v421 = vtanh.pop %v417
      %vm422 = vcmask 203776
      %423 = vst.msk [vmem:[%s197] sm:$0xff] %vm422, %v420
      %424 = vst.msk [vmem:[%s197 + $0x8] sm:$0xff] %vm422, %v421
      %p425 = scmp.lt.s32.totalorder %s15, 1
      %s426 = scalar_select %p425, %s15, 1
      %s427 = smul.addr %s426, 2
      %s428 = smul.addr %s427, 8
      %s429 = scalar_lea.vmem %s4, %s428
      // Predicated region
      $region37: #{lenet5_forward.4} parent=35 // pred_check
        %p430 = pneg %p122
      $region38: #{lenet5_forward.4} parent=35 // pred_check_branch
        %432 = sbr.rel (%p430) target = $region40
      $region39: #{lenet5_forward.4} parent=35 // pred_region
        _
      $region40: #{lenet5_forward.4} parent=35 // pred_fallthru
        _
    $region36: #{lenet5_forward.4} parent=5 // pred_fallthru
      _
    %p433 = scmp.le.s32.totalorder 2, %s10
    // Predicated region
    $region41: #{lenet5_forward.4} parent=5 // pred_check
      %p434 = pneg %p433
    $region42: #{lenet5_forward.4} parent=5 // pred_check_branch
      %436 = sbr.rel (%p434) target = $region44
    $region43: #{lenet5_forward.4} parent=5 // pred_region
      %s437 = ssub.s32 %s10, 2
      // Predicated region
      $region45: #{lenet5_forward.4} parent=43 // pred_check
        %p438 = pneg %p128
      $region46: #{lenet5_forward.4} parent=43 // pred_check_branch
        %440 = sbr.rel (%p438) target = $region48
      $region47: #{lenet5_forward.4} parent=43 // pred_region
        %p441 = scmp.lt.s32.totalorder %s16, 1
        %s442 = scalar_select %p441, %s16, 1
        %s443 = smul.addr %s442, 2
        %s444 = smul.addr %s443, 8
        %s445 = scalar_lea.vmem %s4, %s444
      $region48: #{lenet5_forward.4} parent=43 // pred_fallthru
        _
    $region44: #{lenet5_forward.4} parent=5 // pred_fallthru
      _
  $region6: #{lenet5_forward.4} parent=0 // loop_footer
    %s14 = sadd.s32 1, %s10
  $region7: #{lenet5_forward.4} parent=0 // loop_footer_branch
    %9 = sbr.rel target = $region3
  $region8: #{lenet5_forward.4} parent=0 // loop_exit
    _

// kernel: lenet5_forward.5
$region0: #{lenet5_forward.5}
  #allocation0 [shape = 'u32[]', space=smem, size = 0x4, offset = 0x4, fixed_abs, tag = 'smem constant byte address 0x4 - core index']
  #allocation1 [shape = 'u32[144,128]{1,0:T(1,128)}', space=vmem, size = 0x12000, scoped, tag = 'internal scratch']
  %s0 = inlined_call_operand.vmem [shape: f32[400,2], index: 0, kind: input, shape index: {}]
  %s1 = inlined_call_operand.vmem [shape: f32[120,400], index: 1, kind: input, shape index: {}]
  %s2 = inlined_call_operand.vmem [shape: f32[120,1], index: 2, kind: input, shape index: {}]
  %s3 = inlined_call_operand.vmem [shape: f32[84,120], index: 3, kind: input, shape index: {}]
  %s4 = inlined_call_operand.vmem [shape: f32[84,1], index: 4, kind: input, shape index: {}]
  %s5 = inlined_call_operand.vmem [shape: f32[10,84], index: 5, kind: input, shape index: {}]
  %s6 = inlined_call_operand.vmem [shape: f32[10,1], index: 6, kind: input, shape index: {}]
  %s7 = inlined_call_operand.vmem [shape: f32[10,2], index: 7, kind: output, shape index: {}]
  %s8 = sld [smem:[#allocation0]]
  $region38: #{lenet5_forward.5} parent=0
    _
  %s10 = ssub.s32 1, %s8
  %s11 = scalar_select 0, %s10, %s8
  // Predicated region
  $region2: #{lenet5_forward.5} parent=0 // pred_check
    _
  $region3: #{lenet5_forward.5} parent=0 // pred_check_branch
    %13 = sbr.rel (0) target = $region5
  $region4: #{lenet5_forward.5} parent=0 // pred_region
    _
  $region5: #{lenet5_forward.5} parent=0 // pred_fallthru
    _
  // Predicated region
  $region6: #{lenet5_forward.5} parent=0 // pred_check
    _
  $region7: #{lenet5_forward.5} parent=0 // pred_check_branch
    %15 = sbr.rel (0) target = $region9
  $region8: #{lenet5_forward.5} parent=0 // pred_region
    _
  $region9: #{lenet5_forward.5} parent=0 // pred_fallthru
    _
  // Predicated region
  $region10: #{lenet5_forward.5} parent=0 // pred_check
    _
  $region11: #{lenet5_forward.5} parent=0 // pred_check_branch
    %17 = sbr.rel (0) target = $region13
  $region12: #{lenet5_forward.5} parent=0 // pred_region
    _
  $region13: #{lenet5_forward.5} parent=0 // pred_fallthru
    _
  // Predicated region
  $region14: #{lenet5_forward.5} parent=0 // pred_check
    _
  $region15: #{lenet5_forward.5} parent=0 // pred_check_branch
    %19 = sbr.rel (0) target = $region17
  $region16: #{lenet5_forward.5} parent=0 // pred_region
    _
  $region17: #{lenet5_forward.5} parent=0 // pred_fallthru
    _
  // Predicated region
  $region18: #{lenet5_forward.5} parent=0 // pred_check
    _
  $region19: #{lenet5_forward.5} parent=0 // pred_check_branch
    %21 = sbr.rel (0) target = $region21
  $region20: #{lenet5_forward.5} parent=0 // pred_region
    _
  $region21: #{lenet5_forward.5} parent=0 // pred_fallthru
    _
  // Predicated region
  $region22: #{lenet5_forward.5} parent=0 // pred_check
    _
  $region23: #{lenet5_forward.5} parent=0 // pred_check_branch
    %23 = sbr.rel (0) target = $region25
  $region24: #{lenet5_forward.5} parent=0 // pred_region
    _
  $region25: #{lenet5_forward.5} parent=0 // pred_fallthru
    _
  // Predicated region
  $region26: #{lenet5_forward.5} parent=0 // pred_check
    _
  $region27: #{lenet5_forward.5} parent=0 // pred_check_branch
    %25 = sbr.rel (0) target = $region29
  $region28: #{lenet5_forward.5} parent=0 // pred_region
    _
  $region29: #{lenet5_forward.5} parent=0 // pred_fallthru
    _
  %v26 = vld [vmem:[%s1] sm:$0xff]
  %v27 = vld [vmem:[%s1 + $0x8] sm:$0xff]
  %v28 = vld [vmem:[%s1 + $0x10] sm:$0xff]
  %v29 = vld [vmem:[%s1 + $0x18] sm:$0xff]
  %v30 = vld [vmem:[%s1 + $0x20] sm:$0xff]
  %v31 = vld [vmem:[%s1 + $0x28] sm:$0xff]
  %v32 = vld [vmem:[%s1 + $0x30] sm:$0xff]
  %v33 = vld [vmem:[%s1 + $0x38] sm:$0xff]
  %v34 = vld [vmem:[%s1 + $0x40] sm:$0xff]
  %v35 = vld [vmem:[%s1 + $0x48] sm:$0xff]
  %v36 = vld [vmem:[%s1 + $0x50] sm:$0xff]
  %v37 = vld [vmem:[%s1 + $0x58] sm:$0xff]
  %v38 = vld [vmem:[%s1 + $0x60] sm:$0xff]
  %v39 = vld [vmem:[%s1 + $0x68] sm:$0xff]
  %v40 = vld [vmem:[%s1 + $0x70] sm:$0xff]
  %v41 = vld [vmem:[%s1 + $0x78] sm:$0xff]
  %v42 = vld [vmem:[%s1 + $0x80] sm:$0xff]
  %v43 = vld [vmem:[%s1 + $0x88] sm:$0xff]
  %v44 = vld [vmem:[%s1 + $0x90] sm:$0xff]
  %v45 = vld [vmem:[%s1 + $0x98] sm:$0xff]
  %v46 = vld [vmem:[%s1 + $0xa0] sm:$0xff]
  %v47 = vld [vmem:[%s1 + $0xa8] sm:$0xff]
  %v48 = vld [vmem:[%s1 + $0xb0] sm:$0xff]
  %v49 = vld [vmem:[%s1 + $0xb8] sm:$0xff]
  %v50 = vld [vmem:[%s1 + $0xc0] sm:$0xff]
  %v51 = vld [vmem:[%s1 + $0xc8] sm:$0xff]
  %v52 = vld [vmem:[%s1 + $0xd0] sm:$0xff]
  %v53 = vld [vmem:[%s1 + $0xd8] sm:$0xff]
  %v54 = vld [vmem:[%s1 + $0xe0] sm:$0xff]
  %v55 = vld [vmem:[%s1 + $0xe8] sm:$0xff]
  %v56 = vld [vmem:[%s1 + $0xf0] sm:$0xff]
  %v57 = vld [vmem:[%s1 + $0xf8] sm:$0xff]
  %v58 = vld [vmem:[%s1 + $0x100] sm:$0xff]
  %v59 = vld [vmem:[%s1 + $0x108] sm:$0xff]
  %v60 = vld [vmem:[%s1 + $0x110] sm:$0xff]
  %v61 = vld [vmem:[%s1 + $0x118] sm:$0xff]
  %v62 = vld [vmem:[%s1 + $0x120] sm:$0xff]
  %v63 = vld [vmem:[%s1 + $0x128] sm:$0xff]
  %v64 = vld [vmem:[%s1 + $0x130] sm:$0xff]
  %v65 = vld [vmem:[%s1 + $0x138] sm:$0xff]
  %v66 = vld [vmem:[%s1 + $0x140] sm:$0xff]
  %v67 = vld [vmem:[%s1 + $0x148] sm:$0xff]
  %v68 = vld [vmem:[%s1 + $0x150] sm:$0xff]
  %v69 = vld [vmem:[%s1 + $0x158] sm:$0xff]
  %v70 = vld [vmem:[%s1 + $0x160] sm:$0xff]
  %v71 = vld [vmem:[%s1 + $0x168] sm:$0xff]
  %v72 = vld [vmem:[%s1 + $0x170] sm:$0xff]
  %v73 = vld [vmem:[%s1 + $0x178] sm:$0xff]
  %v74 = vld [vmem:[%s1 + $0x180] sm:$0xff]
  %v75 = vld [vmem:[%s1 + $0x188] sm:$0xff]
  %v76 = vld [vmem:[%s1 + $0x190] sm:$0xff]
  %v77 = vld [vmem:[%s1 + $0x198] sm:$0xff]
  %v78 = vld [vmem:[%s1 + $0x1a0] sm:$0xff]
  %v79 = vld [vmem:[%s1 + $0x1a8] sm:$0xff]
  %v80 = vld [vmem:[%s1 + $0x1b0] sm:$0xff]
  %v81 = vld [vmem:[%s1 + $0x1b8] sm:$0xff]
  %v82 = vld [vmem:[%s1 + $0x1c0] sm:$0xff]
  %v83 = vld [vmem:[%s1 + $0x1c8] sm:$0xff]
  %v84 = vld [vmem:[%s1 + $0x1d0] sm:$0xff]
  %v85 = vld [vmem:[%s1 + $0x1d8] sm:$0xff]
  %v86 = vld [vmem:[%s0] sm:$0xff]
  %v87 = vld [vmem:[%s0 + $0x8] sm:$0xff]
  %v88 = vld [vmem:[%s0 + $0x10] sm:$0xff]
  %v89 = vld [vmem:[%s0 + $0x18] sm:$0xff]
  %v90 = vld [vmem:[%s0 + $0x20] sm:$0xff]
  %v91 = vld [vmem:[%s0 + $0x28] sm:$0xff]
  %v92 = vld [vmem:[%s0 + $0x30] sm:$0xff]
  %v93 = vld [vmem:[%s0 + $0x38] sm:$0xff]
  %v94 = vld [vmem:[%s0 + $0x40] sm:$0xff]
  %v95 = vld [vmem:[%s0 + $0x48] sm:$0xff]
  %v96 = vld [vmem:[%s0 + $0x50] sm:$0xff]
  %v97 = vld [vmem:[%s0 + $0x58] sm:$0xff]
  %v98 = vld [vmem:[%s0 + $0x60] sm:$0xff]
  %v99 = vld [vmem:[%s0 + $0x68] sm:$0xff]
  %v100 = vld [vmem:[%s0 + $0x70] sm:$0xff]
  %v101 = vld [vmem:[%s0 + $0x78] sm:$0xff]
  %v102 = vld [vmem:[%s0 + $0x80] sm:$0xff]
  %v103 = vld [vmem:[%s0 + $0x88] sm:$0xff]
  %v104 = vld [vmem:[%s0 + $0x90] sm:$0xff]
  %v105 = vld [vmem:[%s0 + $0x98] sm:$0xff]
  %v106 = vld [vmem:[%s0 + $0xa0] sm:$0xff]
  %v107 = vld [vmem:[%s0 + $0xa8] sm:$0xff]
  %v108 = vld [vmem:[%s0 + $0xb0] sm:$0xff]
  %v109 = vld [vmem:[%s0 + $0xb8] sm:$0xff]
  %v110 = vld [vmem:[%s0 + $0xc0] sm:$0xff]
  %v111 = vld [vmem:[%s0 + $0xc8] sm:$0xff]
  %v112 = vld [vmem:[%s0 + $0xd0] sm:$0xff]
  %v113 = vld [vmem:[%s0 + $0xd8] sm:$0xff]
  %v114 = vld [vmem:[%s0 + $0xe0] sm:$0xff]
  %v115 = vld [vmem:[%s0 + $0xe8] sm:$0xff]
  %v116 = vld [vmem:[%s0 + $0xf0] sm:$0xff]
  %v117 = vld [vmem:[%s0 + $0xf8] sm:$0xff]
  %v118 = vld [vmem:[%s0 + $0x100] sm:$0xff]
  %v119 = vld [vmem:[%s0 + $0x108] sm:$0xff]
  %v120 = vld [vmem:[%s0 + $0x110] sm:$0xff]
  %v121 = vld [vmem:[%s0 + $0x118] sm:$0xff]
  %v122 = vld [vmem:[%s0 + $0x120] sm:$0xff]
  %v123 = vld [vmem:[%s0 + $0x128] sm:$0xff]
  %v124 = vld [vmem:[%s0 + $0x130] sm:$0xff]
  %v125 = vld [vmem:[%s0 + $0x138] sm:$0xff]
  %v126 = vld [vmem:[%s0 + $0x140] sm:$0xff]
  %v127 = vld [vmem:[%s0 + $0x148] sm:$0xff]
  %v128 = vld [vmem:[%s0 + $0x150] sm:$0xff]
  %v129 = vld [vmem:[%s0 + $0x158] sm:$0xff]
  %v130 = vld [vmem:[%s0 + $0x160] sm:$0xff]
  %v131 = vld [vmem:[%s0 + $0x168] sm:$0xff]
  %v132 = vld [vmem:[%s0 + $0x170] sm:$0xff]
  %v133 = vld [vmem:[%s0 + $0x178] sm:$0xff]
  %v134 = vld [vmem:[%s0 + $0x180] sm:$0xff]
  %v135 = vld [vmem:[%s0 + $0x188] sm:$0xff]
  %v136 = vld [vmem:[%s2] sm:$0xff]
  %v137 = vld [vmem:[%s2 + $0x8] sm:$0xff]
  %v138 = vld [vmem:[%s2 + $0x10] sm:$0xff]
  %v139 = vld [vmem:[%s2 + $0x18] sm:$0xff]
  %v140 = vld [vmem:[%s2 + $0x20] sm:$0xff]
  %v141 = vld [vmem:[%s2 + $0x28] sm:$0xff]
  %v142 = vld [vmem:[%s2 + $0x30] sm:$0xff]
  %v143 = vld [vmem:[%s2 + $0x38] sm:$0xff]
  %v144 = vld [vmem:[%s2 + $0x40] sm:$0xff]
  %v145 = vld [vmem:[%s2 + $0x48] sm:$0xff]
  %v146 = vld [vmem:[%s2 + $0x50] sm:$0xff]
  %v147 = vld [vmem:[%s2 + $0x58] sm:$0xff]
  %v148 = vld [vmem:[%s2 + $0x60] sm:$0xff]
  %v149 = vld [vmem:[%s2 + $0x68] sm:$0xff]
  %v150 = vld [vmem:[%s2 + $0x70] sm:$0xff]
  %152 = vset.pattern.permute.xlu0 0
  %153 = vperm.xlu0 %152, %v136
  %v154 = vpop.permute.xlu0 %153
  %157 = vset.pattern.permute.xlu0 0
  %158 = vperm.xlu0 %157, %v137
  %v159 = vpop.permute.xlu0 %158
  %162 = vset.pattern.permute.xlu0 0
  %163 = vperm.xlu0 %162, %v138
  %v164 = vpop.permute.xlu0 %163
  %167 = vset.pattern.permute.xlu0 0
  %168 = vperm.xlu0 %167, %v139
  %v169 = vpop.permute.xlu0 %168
  %172 = vset.pattern.permute.xlu0 0
  %173 = vperm.xlu0 %172, %v140
  %v174 = vpop.permute.xlu0 %173
  %177 = vset.pattern.permute.xlu0 0
  %178 = vperm.xlu0 %177, %v141
  %v179 = vpop.permute.xlu0 %178
  %182 = vset.pattern.permute.xlu0 0
  %183 = vperm.xlu0 %182, %v142
  %v184 = vpop.permute.xlu0 %183
  %187 = vset.pattern.permute.xlu0 0
  %188 = vperm.xlu0 %187, %v143
  %v189 = vpop.permute.xlu0 %188
  %192 = vset.pattern.permute.xlu0 0
  %193 = vperm.xlu0 %192, %v144
  %v194 = vpop.permute.xlu0 %193
  %197 = vset.pattern.permute.xlu0 0
  %198 = vperm.xlu0 %197, %v145
  %v199 = vpop.permute.xlu0 %198
  %202 = vset.pattern.permute.xlu0 0
  %203 = vperm.xlu0 %202, %v146
  %v204 = vpop.permute.xlu0 %203
  %207 = vset.pattern.permute.xlu0 0
  %208 = vperm.xlu0 %207, %v147
  %v209 = vpop.permute.xlu0 %208
  %212 = vset.pattern.permute.xlu0 0
  %213 = vperm.xlu0 %212, %v148
  %v214 = vpop.permute.xlu0 %213
  %217 = vset.pattern.permute.xlu0 0
  %218 = vperm.xlu0 %217, %v149
  %v219 = vpop.permute.xlu0 %218
  %222 = vset.pattern.permute.xlu0 0
  %223 = vperm.xlu0 %222, %v150
  %v224 = vpop.permute.xlu0 %223
  %vm226 = vcmask 130048
  %v228 = vsel %vm226, %v29, 0
  %v231 = vsel %vm226, %v33, 0
  %v234 = vsel %vm226, %v37, 0
  %v237 = vsel %vm226, %v41, 0
  %v240 = vsel %vm226, %v45, 0
  %v243 = vsel %vm226, %v49, 0
  %v246 = vsel %vm226, %v53, 0
  %v249 = vsel %vm226, %v57, 0
  %v252 = vsel %vm226, %v61, 0
  %v255 = vsel %vm226, %v65, 0
  %v258 = vsel %vm226, %v69, 0
  %v261 = vsel %vm226, %v73, 0
  %v264 = vsel %vm226, %v77, 0
  %v267 = vsel %vm226, %v81, 0
  %v270 = vsel %vm226, %v85, 0
  %272 = vmatprep.subr.mxu0 0.0
  %273 = vmatpush1.msra.mxu0 %v86
  %274 = vmatprep.subr.mxu0 0.0
  %275 = vmatpush1.msra.mxu0 %v87
  %276 = vmatprep.subr.mxu0 0.0
  %277 = vmatpush1.msra.mxu0 %v88
  %278 = vmatprep.subr.mxu0 0.0
  %279 = vmatpush1.msra.mxu0 %v89
  %280 = vmatprep.subr.mxu0 0.0
  %281 = vmatpush1.msra.mxu0 %v90
  %282 = vmatprep.subr.mxu0 0.0
  %283 = vmatpush1.msra.mxu0 %v91
  %284 = vmatprep.subr.mxu0 0.0
  %285 = vmatpush1.msra.mxu0 %v92
  %286 = vmatprep.subr.mxu0 0.0
  %287 = vmatpush1.msra.mxu0 %v93
  %288 = vmatprep.subr.mxu0 0.0
  %289 = vmatpush1.msra.mxu0 %v94
  %290 = vmatprep.subr.mxu0 0.0
  %291 = vmatpush1.msra.mxu0 %v95
  %292 = vmatprep.subr.mxu0 0.0
  %293 = vmatpush1.msra.mxu0 %v96
  %294 = vmatprep.subr.mxu0 0.0
  %295 = vmatpush1.msra.mxu0 %v97
  %296 = vmatprep.subr.mxu0 0.0
  %297 = vmatpush1.msra.mxu0 %v98
  %298 = vmatprep.subr.mxu0 0.0
  %299 = vmatpush1.msra.mxu0 %v99
  %300 = vmatprep.subr.mxu0 0.0
  %301 = vmatpush1.msra.mxu0 %v100
  %302 = vmatprep.subr.mxu0 0.0
  %303 = vmatpush1.msra.mxu0 %v101
  %304 = vmatprep.subr.mxu0 0.0
  %305 = vmatpush1.msra.mxu0 %v102
  %306 = vmatprep.subr.mxu0 0.0
  %307 = vmatpush1.msra.mxu0 %v103
  %308 = vmatprep.subr.mxu0 0.0
  %309 = vmatpush1.msra.mxu0 %v104
  %310 = vmatprep.subr.mxu0 0.0
  %311 = vmatpush1.msra.mxu0 %v105
  %312 = vmatprep.subr.mxu0 0.0
  %313 = vmatpush1.msra.mxu0 %v106
  %314 = vmatprep.subr.mxu0 0.0
  %315 = vmatpush1.msra.mxu0 %v107
  %316 = vmatprep.subr.mxu0 0.0
  %317 = vmatpush1.msra.mxu0 %v108
  %318 = vmatprep.subr.mxu0 0.0
  %319 = vmatpush1.msra.mxu0 %v109
  %320 = vmatprep.subr.mxu0 0.0
  %321 = vmatpush1.msra.mxu0 %v110
  %322 = vmatprep.subr.mxu0 0.0
  %323 = vmatpush1.msra.mxu0 %v111
  %324 = vmatprep.subr.mxu0 0.0
  %325 = vmatpush1.msra.mxu0 %v112
  %326 = vmatprep.subr.mxu0 0.0
  %327 = vmatpush1.msra.mxu0 %v113
  %328 = vmatprep.subr.mxu0 0.0
  %329 = vmatpush1.msra.mxu0 %v114
  %330 = vmatprep.subr.mxu0 0.0
  %331 = vmatpush1.msra.mxu0 %v115
  %332 = vmatprep.subr.mxu0 0.0
  %333 = vmatpush1.msra.mxu0 %v116
  %334 = vmatprep.subr.mxu0 0.0
  %335 = vmatpush1.msra.mxu0 %v117
  %336 = vmatprep.mubr.f32.mxu0 %v27
  %337 = vmatmul.mubr.f32.gmra.mrb[0].mxu0 %v26
  %v338 = vpop.f32.mrb[0].mxu0
  %v339 = vadd.f32 %v154, %v338
  %v340 = vpop.f32.mrb[0].mxu0
  %341 = vmatprep.mubr.f32.mxu0 %v31
  %342 = vmatmul.mubr.f32.gmra.mrb[0].mxu0 %v30
  %v343 = vpop.f32.mrb[0].mxu0
  %v344 = vadd.f32 %v159, %v343
  %v345 = vpop.f32.mrb[0].mxu0
  %346 = vmatprep.mubr.f32.mxu0 %v35
  %347 = vmatmul.mubr.f32.gmra.mrb[0].mxu0 %v34
  %v348 = vpop.f32.mrb[0].mxu0
  %v349 = vadd.f32 %v164, %v348
  %v350 = vpop.f32.mrb[0].mxu0
  %351 = vmatprep.mubr.f32.mxu0 %v39
  %352 = vmatmul.mubr.f32.gmra.mrb[0].mxu0 %v38
  %v353 = vpop.f32.mrb[0].mxu0
  %v354 = vadd.f32 %v169, %v353
  %v355 = vpop.f32.mrb[0].mxu0
  %356 = vmatprep.mubr.f32.mxu0 %v43
  %357 = vmatmul.mubr.f32.gmra.mrb[0].mxu0 %v42
  %v358 = vpop.f32.mrb[0].mxu0
  %v359 = vadd.f32 %v174, %v358
  %v360 = vpop.f32.mrb[0].mxu0
  %361 = vmatprep.mubr.f32.mxu0 %v47
  %362 = vmatmul.mubr.f32.gmra.mrb[0].mxu0 %v46
  %v363 = vpop.f32.mrb[0].mxu0
  %v364 = vadd.f32 %v179, %v363
  %v365 = vpop.f32.mrb[0].mxu0
  %366 = vmatprep.mubr.f32.mxu0 %v51
  %367 = vmatmul.mubr.f32.gmra.mrb[0].mxu0 %v50
  %v368 = vpop.f32.mrb[0].mxu0
  %v369 = vadd.f32 %v184, %v368
  %v370 = vpop.f32.mrb[0].mxu0
  %371 = vmatprep.mubr.f32.mxu0 %v55
  %372 = vmatmul.mubr.f32.gmra.mrb[0].mxu0 %v54
  %v373 = vpop.f32.mrb[0].mxu0
  %v374 = vadd.f32 %v189, %v373
  %v375 = vpop.f32.mrb[0].mxu0
  %376 = vmatprep.mubr.f32.mxu0 %v59
  %377 = vmatmul.mubr.f32.gmra.mrb[0].mxu0 %v58
  %v378 = vpop.f32.mrb[0].mxu0
  %v379 = vadd.f32 %v194, %v378
  %v380 = vpop.f32.mrb[0].mxu0
  %381 = vmatprep.mubr.f32.mxu0 %v63
  %382 = vmatmul.mubr.f32.gmra.mrb[0].mxu0 %v62
  %v383 = vpop.f32.mrb[0].mxu0
  %v384 = vadd.f32 %v199, %v383
  %v385 = vpop.f32.mrb[0].mxu0
  %386 = vmatprep.mubr.f32.mxu0 %v67
  %387 = vmatmul.mubr.f32.gmra.mrb[0].mxu0 %v66
  %v388 = vpop.f32.mrb[0].mxu0
  %v389 = vadd.f32 %v204, %v388
  %v390 = vpop.f32.mrb[0].mxu0
  %391 = vmatprep.mubr.f32.mxu0 %v71
  %392 = vmatmul.mubr.f32.gmra.mrb[0].mxu0 %v70
  %v393 = vpop.f32.mrb[0].mxu0
  %v394 = vadd.f32 %v209, %v393
  %v395 = vpop.f32.mrb[0].mxu0
  %396 = vmatprep.mubr.f32.mxu0 %v75
  %397 = vmatmul.mubr.f32.gmra.mrb[0].mxu0 %v74
  %v398 = vpop.f32.mrb[0].mxu0
  %v399 = vadd.f32 %v214, %v398
  %v400 = vpop.f32.mrb[0].mxu0
  %401 = vmatprep.mubr.f32.mxu0 %v79
  %402 = vmatmul.mubr.f32.gmra.mrb[0].mxu0 %v78
  %v403 = vpop.f32.mrb[0].mxu0
  %v404 = vadd.f32 %v219, %v403
  %v405 = vpop.f32.mrb[0].mxu0
  %406 = vmatprep.mubr.f32.mxu0 %v83
  %407 = vmatmul.mubr.f32.gmra.mrb[0].mxu0 %v82
  %v408 = vpop.f32.mrb[0].mxu0
  %v409 = vadd.f32 %v224, %v408
  %v410 = vpop.f32.mrb[0].mxu0
  %411 = vdwg.mxu0
  %412 = vmatprep.subr.mxu0 0.0
  %413 = vmatpush1.msra.mxu0 %v118
  %414 = vmatprep.subr.mxu0 0.0
  %415 = vmatpush1.msra.mxu0 %v119
  %416 = vmatprep.subr.mxu0 0.0
  %417 = vmatpush1.msra.mxu0 %v120
  %418 = vmatprep.subr.mxu0 0.0
  %419 = vmatpush1.msra.mxu0 %v121
  %420 = vmatprep.subr.mxu0 0.0
  %421 = vmatpush1.msra.mxu0 %v122
  %422 = vmatprep.subr.mxu0 0.0
  %423 = vmatpush1.msra.mxu0 %v123
  %424 = vmatprep.subr.mxu0 0.0
  %425 = vmatpush1.msra.mxu0 %v124
  %426 = vmatprep.subr.mxu0 0.0
  %427 = vmatpush1.msra.mxu0 %v125
  %428 = vmatprep.subr.mxu0 0.0
  %429 = vmatpush1.msra.mxu0 %v126
  %430 = vmatprep.subr.mxu0 0.0
  %431 = vmatpush1.msra.mxu0 %v127
  %432 = vmatprep.subr.mxu0 0.0
  %433 = vmatpush1.msra.mxu0 %v128
  %434 = vmatprep.subr.mxu0 0.0
  %435 = vmatpush1.msra.mxu0 %v129
  %436 = vmatprep.subr.mxu0 0.0
  %437 = vmatpush1.msra.mxu0 %v130
  %438 = vmatprep.subr.mxu0 0.0
  %439 = vmatpush1.msra.mxu0 %v131
  %440 = vmatprep.subr.mxu0 0.0
  %441 = vmatpush1.msra.mxu0 %v132
  %442 = vmatprep.subr.mxu0 0.0
  %443 = vmatpush1.msra.mxu0 %v133
  %444 = vmatprep.subr.mxu0 0.0
  %445 = vmatpush1.msra.mxu0 %v134
  %446 = vmatprep.subr.mxu0 0.0
  %447 = vmatpush1.msra.mxu0 %v135
  %448 = vmatprep.subr.mxu0 0.0
  %449 = vmatpush1.msra.mxu0 0.0
  %450 = vmatprep.subr.mxu0 0.0
  %451 = vmatpush1.msra.mxu0 0.0
  %452 = vmatprep.subr.mxu0 0.0
  %453 = vmatpush1.msra.mxu0 0.0
  %454 = vmatprep.subr.mxu0 0.0
  %455 = vmatpush1.msra.mxu0 0.0
  %456 = vmatprep.subr.mxu0 0.0
  %457 = vmatpush1.msra.mxu0 0.0
  %458 = vmatprep.subr.mxu0 0.0
  %459 = vmatpush1.msra.mxu0 0.0
  %460 = vmatprep.subr.mxu0 0.0
  %461 = vmatpush1.msra.mxu0 0.0
  %462 = vmatprep.subr.mxu0 0.0
  %463 = vmatpush1.msra.mxu0 0.0
  %464 = vmatprep.subr.mxu0 0.0
  %465 = vmatpush1.msra.mxu0 0.0
  %466 = vmatprep.subr.mxu0 0.0
  %467 = vmatpush1.msra.mxu0 0.0
  %468 = vmatprep.subr.mxu0 0.0
  %469 = vmatpush1.msra.mxu0 0.0
  %470 = vmatprep.subr.mxu0 0.0
  %471 = vmatpush1.msra.mxu0 0.0
  %472 = vmatprep.subr.mxu0 0.0
  %473 = vmatpush1.msra.mxu0 0.0
  %474 = vmatprep.subr.mxu0 0.0
  %475 = vmatpush1.msra.mxu0 0.0
  %476 = vmatprep.mubr.f32.mxu0 %v228
  %477 = vmatmul.mubr.f32.gmra.mrb[0].mxu0 %v28
  %v478 = vpop.f32.mrb[0].mxu0
  %v479 = vadd.f32 %v339, %v478
  %v480 = vpop.f32.mrb[0].mxu0
  %481 = vmatprep.mubr.f32.mxu0 %v231
  %482 = vmatmul.mubr.f32.gmra.mrb[0].mxu0 %v32
  %v483 = vpop.f32.mrb[0].mxu0
  %v484 = vadd.f32 %v344, %v483
  %v485 = vpop.f32.mrb[0].mxu0
  %486 = vmatprep.mubr.f32.mxu0 %v234
  %487 = vmatmul.mubr.f32.gmra.mrb[0].mxu0 %v36
  %v488 = vpop.f32.mrb[0].mxu0
  %v489 = vadd.f32 %v349, %v488
  %v490 = vpop.f32.mrb[0].mxu0
  %491 = vmatprep.mubr.f32.mxu0 %v237
  %492 = vmatmul.mubr.f32.gmra.mrb[0].mxu0 %v40
  %v493 = vpop.f32.mrb[0].mxu0
  %v494 = vadd.f32 %v354, %v493
  %v495 = vpop.f32.mrb[0].mxu0
  %496 = vmatprep.mubr.f32.mxu0 %v240
  %497 = vmatmul.mubr.f32.gmra.mrb[0].mxu0 %v44
  %v498 = vpop.f32.mrb[0].mxu0
  %v499 = vadd.f32 %v359, %v498
  %v500 = vpop.f32.mrb[0].mxu0
  %501 = vmatprep.mubr.f32.mxu0 %v243
  %502 = vmatmul.mubr.f32.gmra.mrb[0].mxu0 %v48
  %v503 = vpop.f32.mrb[0].mxu0
  %v504 = vadd.f32 %v364, %v503
  %v505 = vpop.f32.mrb[0].mxu0
  %506 = vmatprep.mubr.f32.mxu0 %v246
  %507 = vmatmul.mubr.f32.gmra.mrb[0].mxu0 %v52
  %v508 = vpop.f32.mrb[0].mxu0
  %v509 = vadd.f32 %v369, %v508
  %v510 = vpop.f32.mrb[0].mxu0
  %511 = vmatprep.mubr.f32.mxu0 %v249
  %512 = vmatmul.mubr.f32.gmra.mrb[0].mxu0 %v56
  %v513 = vpop.f32.mrb[0].mxu0
  %v514 = vadd.f32 %v374, %v513
  %v515 = vpop.f32.mrb[0].mxu0
  %516 = vmatprep.mubr.f32.mxu0 %v252
  %517 = vmatmul.mubr.f32.gmra.mrb[0].mxu0 %v60
  %v518 = vpop.f32.mrb[0].mxu0
  %v519 = vadd.f32 %v379, %v518
  %v520 = vpop.f32.mrb[0].mxu0
  %521 = vmatprep.mubr.f32.mxu0 %v255
  %522 = vmatmul.mubr.f32.gmra.mrb[0].mxu0 %v64
  %v523 = vpop.f32.mrb[0].mxu0
  %v524 = vadd.f32 %v384, %v523
  %v525 = vpop.f32.mrb[0].mxu0
  %526 = vmatprep.mubr.f32.mxu0 %v258
  %527 = vmatmul.mubr.f32.gmra.mrb[0].mxu0 %v68
  %v528 = vpop.f32.mrb[0].mxu0
  %v529 = vadd.f32 %v389, %v528
  %v530 = vpop.f32.mrb[0].mxu0
  %531 = vmatprep.mubr.f32.mxu0 %v261
  %532 = vmatmul.mubr.f32.gmra.mrb[0].mxu0 %v72
  %v533 = vpop.f32.mrb[0].mxu0
  %v534 = vadd.f32 %v394, %v533
  %v535 = vpop.f32.mrb[0].mxu0
  %536 = vmatprep.mubr.f32.mxu0 %v264
  %537 = vmatmul.mubr.f32.gmra.mrb[0].mxu0 %v76
  %v538 = vpop.f32.mrb[0].mxu0
  %v539 = vadd.f32 %v399, %v538
  %v540 = vpop.f32.mrb[0].mxu0
  %541 = vmatprep.mubr.f32.mxu0 %v267
  %542 = vmatmul.mubr.f32.gmra.mrb[0].mxu0 %v80
  %v543 = vpop.f32.mrb[0].mxu0
  %v544 = vadd.f32 %v404, %v543
  %v545 = vpop.f32.mrb[0].mxu0
  %546 = vmatprep.mubr.f32.mxu0 %v270
  %547 = vmatmul.mubr.f32.gmra.mrb[0].mxu0 %v84
  %v548 = vpop.f32.mrb[0].mxu0
  %v549 = vadd.f32 %v409, %v548
  %v550 = vpop.f32.mrb[0].mxu0
  %551 = vdwg.mxu0
  %v552 = vtanh.pop %v479
  %v553 = vtanh.pop %v484
  %v554 = vtanh.pop %v489
  %v555 = vtanh.pop %v494
  %v556 = vtanh.pop %v499
  %v557 = vtanh.pop %v504
  %v558 = vtanh.pop %v509
  %v559 = vtanh.pop %v514
  %v560 = vtanh.pop %v519
  %v561 = vtanh.pop %v524
  %v562 = vtanh.pop %v529
  %v563 = vtanh.pop %v534
  %v564 = vtanh.pop %v539
  %v565 = vtanh.pop %v544
  %v566 = vtanh.pop %v549
  %v567 = vld [vmem:[%s3] sm:$0xff]
  %v568 = vld [vmem:[%s3 + $0x8] sm:$0xff]
  %v569 = vld [vmem:[%s3 + $0x10] sm:$0xff]
  %v570 = vld [vmem:[%s3 + $0x18] sm:$0xff]
  %v571 = vld [vmem:[%s3 + $0x20] sm:$0xff]
  %v572 = vld [vmem:[%s3 + $0x28] sm:$0xff]
  %v573 = vld [vmem:[%s3 + $0x30] sm:$0xff]
  %v574 = vld [vmem:[%s3 + $0x38] sm:$0xff]
  %v575 = vld [vmem:[%s3 + $0x40] sm:$0xff]
  %v576 = vld [vmem:[%s3 + $0x48] sm:$0xff]
  %v577 = vld [vmem:[%s3 + $0x50] sm:$0xf]
  %v578 = vld [vmem:[%s4] sm:$0xff]
  %v579 = vld [vmem:[%s4 + $0x8] sm:$0xff]
  %v580 = vld [vmem:[%s4 + $0x10] sm:$0xff]
  %v581 = vld [vmem:[%s4 + $0x18] sm:$0xff]
  %v582 = vld [vmem:[%s4 + $0x20] sm:$0xff]
  %v583 = vld [vmem:[%s4 + $0x28] sm:$0xff]
  %v584 = vld [vmem:[%s4 + $0x30] sm:$0xff]
  %v585 = vld [vmem:[%s4 + $0x38] sm:$0xff]
  %v586 = vld [vmem:[%s4 + $0x40] sm:$0xff]
  %v587 = vld [vmem:[%s4 + $0x48] sm:$0xff]
  %v588 = vld [vmem:[%s4 + $0x50] sm:$0xf]
  %590 = vset.pattern.permute.xlu0 0
  %591 = vperm.xlu0 %590, %v578
  %v592 = vpop.permute.xlu0 %591
  %595 = vset.pattern.permute.xlu0 0
  %596 = vperm.xlu0 %595, %v579
  %v597 = vpop.permute.xlu0 %596
  %600 = vset.pattern.permute.xlu0 0
  %601 = vperm.xlu0 %600, %v580
  %v602 = vpop.permute.xlu0 %601
  %605 = vset.pattern.permute.xlu0 0
  %606 = vperm.xlu0 %605, %v581
  %v607 = vpop.permute.xlu0 %606
  %610 = vset.pattern.permute.xlu0 0
  %611 = vperm.xlu0 %610, %v582
  %v612 = vpop.permute.xlu0 %611
  %615 = vset.pattern.permute.xlu0 0
  %616 = vperm.xlu0 %615, %v583
  %v617 = vpop.permute.xlu0 %616
  %620 = vset.pattern.permute.xlu0 0
  %621 = vperm.xlu0 %620, %v584
  %v622 = vpop.permute.xlu0 %621
  %625 = vset.pattern.permute.xlu0 0
  %626 = vperm.xlu0 %625, %v585
  %v627 = vpop.permute.xlu0 %626
  %630 = vset.pattern.permute.xlu0 0
  %631 = vperm.xlu0 %630, %v586
  %v632 = vpop.permute.xlu0 %631
  %635 = vset.pattern.permute.xlu0 0
  %636 = vperm.xlu0 %635, %v587
  %v637 = vpop.permute.xlu0 %636
  %640 = vset.pattern.permute.xlu0 0
  %641 = vperm.xlu0 %640, %v588
  %v642 = vpop.permute.xlu0 %641
  %vm644 = vcmask 982016
  %v646 = vsel %vm644, %v567, 0
  %v649 = vsel %vm644, %v568, 0
  %v652 = vsel %vm644, %v569, 0
  %v655 = vsel %vm644, %v570, 0
  %v658 = vsel %vm644, %v571, 0
  %v661 = vsel %vm644, %v572, 0
  %v664 = vsel %vm644, %v573, 0
  %v667 = vsel %vm644, %v574, 0
  %v670 = vsel %vm644, %v575, 0
  %v673 = vsel %vm644, %v576, 0
  %v676 = vsel %vm644, %v577, 0
  %678 = vmatprep.subr.mxu0 0.0
  %679 = vmatpush1.msra.mxu0 %v552
  %680 = vmatprep.subr.mxu0 0.0
  %681 = vmatpush1.msra.mxu0 %v553
  %682 = vmatprep.subr.mxu0 0.0
  %683 = vmatpush1.msra.mxu0 %v554
  %684 = vmatprep.subr.mxu0 0.0
  %685 = vmatpush1.msra.mxu0 %v555
  %686 = vmatprep.subr.mxu0 0.0
  %687 = vmatpush1.msra.mxu0 %v556
  %688 = vmatprep.subr.mxu0 0.0
  %689 = vmatpush1.msra.mxu0 %v557
  %690 = vmatprep.subr.mxu0 0.0
  %691 = vmatpush1.msra.mxu0 %v558
  %692 = vmatprep.subr.mxu0 0.0
  %693 = vmatpush1.msra.mxu0 %v559
  %694 = vmatprep.subr.mxu0 0.0
  %695 = vmatpush1.msra.mxu0 %v560
  %696 = vmatprep.subr.mxu0 0.0
  %697 = vmatpush1.msra.mxu0 %v561
  %698 = vmatprep.subr.mxu0 0.0
  %699 = vmatpush1.msra.mxu0 %v562
  %700 = vmatprep.subr.mxu0 0.0
  %701 = vmatpush1.msra.mxu0 %v563
  %702 = vmatprep.subr.mxu0 0.0
  %703 = vmatpush1.msra.mxu0 %v564
  %704 = vmatprep.subr.mxu0 0.0
  %705 = vmatpush1.msra.mxu0 %v565
  %706 = vmatprep.subr.mxu0 0.0
  %707 = vmatpush1.msra.mxu0 %v566
  %708 = vmatprep.subr.mxu0 0.0
  %709 = vmatpush1.msra.mxu0 0.0
  %710 = vmatprep.subr.mxu0 0.0
  %711 = vmatpush1.msra.mxu0 0.0
  %712 = vmatprep.subr.mxu0 0.0
  %713 = vmatpush1.msra.mxu0 0.0
  %714 = vmatprep.subr.mxu0 0.0
  %715 = vmatpush1.msra.mxu0 0.0
  %716 = vmatprep.subr.mxu0 0.0
  %717 = vmatpush1.msra.mxu0 0.0
  %718 = vmatprep.subr.mxu0 0.0
  %719 = vmatpush1.msra.mxu0 0.0
  %720 = vmatprep.subr.mxu0 0.0
  %721 = vmatpush1.msra.mxu0 0.0
  %722 = vmatprep.subr.mxu0 0.0
  %723 = vmatpush1.msra.mxu0 0.0
  %724 = vmatprep.subr.mxu0 0.0
  %725 = vmatpush1.msra.mxu0 0.0
  %726 = vmatprep.subr.mxu0 0.0
  %727 = vmatpush1.msra.mxu0 0.0
  %728 = vmatprep.subr.mxu0 0.0
  %729 = vmatpush1.msra.mxu0 0.0
  %730 = vmatprep.subr.mxu0 0.0
  %731 = vmatpush1.msra.mxu0 0.0
  %732 = vmatprep.subr.mxu0 0.0
  %733 = vmatpush1.msra.mxu0 0.0
  %734 = vmatprep.subr.mxu0 0.0
  %735 = vmatpush1.msra.mxu0 0.0
  %736 = vmatprep.subr.mxu0 0.0
  %737 = vmatpush1.msra.mxu0 0.0
  %738 = vmatprep.subr.mxu0 0.0
  %739 = vmatpush1.msra.mxu0 0.0
  %740 = vmatprep.subr.mxu0 0.0
  %741 = vmatpush1.msra.mxu0 0.0
  %742 = vmatprep.mubr.f32.mxu0 0.0
  %743 = vmatmul.mubr.f32.gmra.mrb[0].mxu0 %v646
  %v744 = vpop.f32.mrb[0].mxu0
  %v745 = vadd.f32 %v592, %v744
  %v746 = vpop.f32.mrb[0].mxu0
  %747 = vmatprep.mubr.f32.mxu0 0.0
  %748 = vmatmul.mubr.f32.gmra.mrb[0].mxu0 %v649
  %v749 = vpop.f32.mrb[0].mxu0
  %v750 = vadd.f32 %v597, %v749
  %v751 = vpop.f32.mrb[0].mxu0
  %752 = vmatprep.mubr.f32.mxu0 0.0
  %753 = vmatmul.mubr.f32.gmra.mrb[0].mxu0 %v652
  %v754 = vpop.f32.mrb[0].mxu0
  %v755 = vadd.f32 %v602, %v754
  %v756 = vpop.f32.mrb[0].mxu0
  %757 = vmatprep.mubr.f32.mxu0 0.0
  %758 = vmatmul.mubr.f32.gmra.mrb[0].mxu0 %v655
  %v759 = vpop.f32.mrb[0].mxu0
  %v760 = vadd.f32 %v607, %v759
  %v761 = vpop.f32.mrb[0].mxu0
  %762 = vmatprep.mubr.f32.mxu0 0.0
  %763 = vmatmul.mubr.f32.gmra.mrb[0].mxu0 %v658
  %v764 = vpop.f32.mrb[0].mxu0
  %v765 = vadd.f32 %v612, %v764
  %v766 = vpop.f32.mrb[0].mxu0
  %767 = vmatprep.mubr.f32.mxu0 0.0
  %768 = vmatmul.mubr.f32.gmra.mrb[0].mxu0 %v661
  %v769 = vpop.f32.mrb[0].mxu0
  %v770 = vadd.f32 %v617, %v769
  %v771 = vpop.f32.mrb[0].mxu0
  %772 = vmatprep.mubr.f32.mxu0 0.0
  %773 = vmatmul.mubr.f32.gmra.mrb[0].mxu0 %v664
  %v774 = vpop.f32.mrb[0].mxu0
  %v775 = vadd.f32 %v622, %v774
  %v776 = vpop.f32.mrb[0].mxu0
  %777 = vmatprep.mubr.f32.mxu0 0.0
  %778 = vmatmul.mubr.f32.gmra.mrb[0].mxu0 %v667
  %v779 = vpop.f32.mrb[0].mxu0
  %v780 = vadd.f32 %v627, %v779
  %v781 = vpop.f32.mrb[0].mxu0
  %782 = vmatprep.mubr.f32.mxu0 0.0
  %783 = vmatmul.mubr.f32.gmra.mrb[0].mxu0 %v670
  %v784 = vpop.f32.mrb[0].mxu0
  %v785 = vadd.f32 %v632, %v784
  %v786 = vpop.f32.mrb[0].mxu0
  %787 = vmatprep.mubr.f32.mxu0 0.0
  %788 = vmatmul.mubr.f32.gmra.mrb[0].mxu0 %v673
  %v789 = vpop.f32.mrb[0].mxu0
  %v790 = vadd.f32 %v637, %v789
  %v791 = vpop.f32.mrb[0].mxu0
  %792 = vmatprep.mubr.f32.mxu0 0.0
  %793 = vmatmul.mubr.f32.gmra.mrb[0].mxu0 %v676
  %v794 = vpop.f32.mrb[0].mxu0
  %v795 = vadd.f32 %v642, %v794
  %v796 = vpop.f32.mrb[0].mxu0
  %797 = vdwg.mxu0
  %v798 = vtanh.pop %v745
  %v799 = vtanh.pop %v750
  %v800 = vtanh.pop %v755
  %v801 = vtanh.pop %v760
  %v802 = vtanh.pop %v765
  %v803 = vtanh.pop %v770
  %v804 = vtanh.pop %v775
  %v805 = vtanh.pop %v780
  %v806 = vtanh.pop %v785
  %v807 = vtanh.pop %v790
  %v808 = vtanh.pop %v795
  %v809 = vld [vmem:[%s5] sm:$0xff]
  %v810 = vld [vmem:[%s5 + $0x8] sm:$0x3]
  %v811 = vld [vmem:[%s6] sm:$0xff]
  %v812 = vld [vmem:[%s6 + $0x8] sm:$0x3]
  %814 = vset.pattern.permute.xlu0 0
  %815 = vperm.xlu0 %814, %v811
  %v816 = vpop.permute.xlu0 %815
  %819 = vset.pattern.permute.xlu0 0
  %820 = vperm.xlu0 %819, %v812
  %v821 = vpop.permute.xlu0 %820
  %vm823 = vcmask 687104
  %v825 = vsel %vm823, %v809, 0
  %v828 = vsel %vm823, %v810, 0
  %vm830 = vcmask 1043456
  %v832 = vsel %vm830, %v808, 0
  %834 = vmatprep.subr.mxu0 0.0
  %835 = vmatpush1.msra.mxu0 %v798
  %836 = vmatprep.subr.mxu0 0.0
  %837 = vmatpush1.msra.mxu0 %v799
  %838 = vmatprep.subr.mxu0 0.0
  %839 = vmatpush1.msra.mxu0 %v800
  %840 = vmatprep.subr.mxu0 0.0
  %841 = vmatpush1.msra.mxu0 %v801
  %842 = vmatprep.subr.mxu0 0.0
  %843 = vmatpush1.msra.mxu0 %v802
  %844 = vmatprep.subr.mxu0 0.0
  %845 = vmatpush1.msra.mxu0 %v803
  %846 = vmatprep.subr.mxu0 0.0
  %847 = vmatpush1.msra.mxu0 %v804
  %848 = vmatprep.subr.mxu0 0.0
  %849 = vmatpush1.msra.mxu0 %v805
  %850 = vmatprep.subr.mxu0 0.0
  %851 = vmatpush1.msra.mxu0 %v806
  %852 = vmatprep.subr.mxu0 0.0
  %853 = vmatpush1.msra.mxu0 %v807
  %854 = vmatprep.subr.mxu0 0.0
  %855 = vmatpush1.msra.mxu0 %v832
  %856 = vmatprep.subr.mxu0 0.0
  %857 = vmatpush1.msra.mxu0 0.0
  %858 = vmatprep.subr.mxu0 0.0
  %859 = vmatpush1.msra.mxu0 0.0
  %860 = vmatprep.subr.mxu0 0.0
  %861 = vmatpush1.msra.mxu0 0.0
  %862 = vmatprep.subr.mxu0 0.0
  %863 = vmatpush1.msra.mxu0 0.0
  %864 = vmatprep.subr.mxu0 0.0
  %865 = vmatpush1.msra.mxu0 0.0
  %866 = vmatprep.subr.mxu0 0.0
  %867 = vmatpush1.msra.mxu0 0.0
  %868 = vmatprep.subr.mxu0 0.0
  %869 = vmatpush1.msra.mxu0 0.0
  %870 = vmatprep.subr.mxu0 0.0
  %871 = vmatpush1.msra.mxu0 0.0
  %872 = vmatprep.subr.mxu0 0.0
  %873 = vmatpush1.msra.mxu0 0.0
  %874 = vmatprep.subr.mxu0 0.0
  %875 = vmatpush1.msra.mxu0 0.0
  %876 = vmatprep.subr.mxu0 0.0
  %877 = vmatpush1.msra.mxu0 0.0
  %878 = vmatprep.subr.mxu0 0.0
  %879 = vmatpush1.msra.mxu0 0.0
  %880 = vmatprep.subr.mxu0 0.0
  %881 = vmatpush1.msra.mxu0 0.0
  %882 = vmatprep.subr.mxu0 0.0
  %883 = vmatpush1.msra.mxu0 0.0
  %884 = vmatprep.subr.mxu0 0.0
  %885 = vmatpush1.msra.mxu0 0.0
  %886 = vmatprep.subr.mxu0 0.0
  %887 = vmatpush1.msra.mxu0 0.0
  %888 = vmatprep.subr.mxu0 0.0
  %889 = vmatpush1.msra.mxu0 0.0
  %890 = vmatprep.subr.mxu0 0.0
  %891 = vmatpush1.msra.mxu0 0.0
  %892 = vmatprep.subr.mxu0 0.0
  %893 = vmatpush1.msra.mxu0 0.0
  %894 = vmatprep.subr.mxu0 0.0
  %895 = vmatpush1.msra.mxu0 0.0
  %896 = vmatprep.subr.mxu0 0.0
  %897 = vmatpush1.msra.mxu0 0.0
  %898 = vmatprep.mubr.f32.mxu0 0.0
  %899 = vmatmul.mubr.f32.gmra.mrb[0].mxu0 %v825
  %v900 = vpop.f32.mrb[0].mxu0
  %v901 = vadd.f32 %v816, %v900
  %v902 = vpop.f32.mrb[0].mxu0
  %903 = vmatprep.mubr.f32.mxu0 0.0
  %904 = vmatmul.mubr.f32.gmra.mrb[0].mxu0 %v828
  %v905 = vpop.f32.mrb[0].mxu0
  %v906 = vadd.f32 %v821, %v905
  %v907 = vpop.f32.mrb[0].mxu0
  %908 = vdwg.mxu0
  %vm909 = vcmask 15360
  %910 = vst.msk [vmem:[%s7] sm:$0xff] %vm909, %v901
  %vm911 = vcmask 9216
  %912 = vst.msk [vmem:[%s7 + $0x8] sm:$0x3] %vm911, %v906
  // Predicated region
  $region30: #{lenet5_forward.5} parent=0 // pred_check
    _
  $region31: #{lenet5_forward.5} parent=0 // pred_check_branch
    %914 = sbr.rel (0) target = $region33
  $region32: #{lenet5_forward.5} parent=0 // pred_region
    _
  $region33: #{lenet5_forward.5} parent=0 // pred_fallthru
    _
  // Predicated region
  $region34: #{lenet5_forward.5} parent=0 // pred_check
    _
  $region35: #{lenet5_forward.5} parent=0 // pred_check_branch
    %916 = sbr.rel (0) target = $region37
  $region36: #{lenet5_forward.5} parent=0 // pred_region
    _
  $region37: #{lenet5_forward.5} parent=0 // pred_fallthru
    _

</llo_original>
